<compile_context>
chip_gen: v5e
topology: v5e:2x2
jax: 0.10.0
libtpu: 0.0.40
codegen_flags: <defaults>
</compile_context>

<pallas_src>
import jax
import jax.numpy as jnp
from jax.experimental import pallas as pl
from jax.experimental.pallas import tpu as pltpu

# ------------------------- model dimensions (small) -------------------------
B = 2            # batch
FRAME_LEN = 32   # samples per frame (stand-in for STFT window/hop)
T = 16           # number of frames
T_WAV = T * FRAME_LEN
N_FEATS = 24     # "mel" features (80 in real ECAPA)
C = 32           # block channels (1024 in real ECAPA)
C_MFA = 48       # MFA channels (1536 in real ECAPA)
ATT_H = 16       # attention hidden dim
EMB = 16         # embedding dim (192 in real ECAPA)
EMB_PAD = 128    # lane-dense padded embedding width (sliced back to EMB outside)
PAD_ROWS = 8     # fixed sublane-aligned halo for the in-kernel conv padding
LANES = 128

# (K, dilation, Cin, Cout) — static Python config (compile-time constants only).
BLOCK_CFG = (
    (5, 1, N_FEATS, C),
    (3, 2, C, C),
    (3, 3, C, C),
    (3, 4, C, C),
)

# ---- packed operand layout (compile-time constants) ----
# All matmul weights in ONE lane-padded bf16 slab (row-stacked); all BN affines /
# biases / small vectors in ONE (16, 128) f32 slab.  -> 3 kernel inputs total.
_W_SHAPES = (
    ("w0", BLOCK_CFG[0][0] * FRAME_LEN, C),   # frame->feature projection folded in
    ("w1", BLOCK_CFG[1][0] * C, C),
    ("w2", BLOCK_CFG[2][0] * C, C),
    ("w3", BLOCK_CFG[3][0] * C, C),
    ("wm", 3 * C, C_MFA),
    ("aw1", C_MFA, ATT_H),
    ("fw", 2 * C_MFA, EMB_PAD),
)
_W_OFF = {}
_row = 0
for _name, _r, _c in _W_SHAPES:
    _W_OFF[_name] = (_row, _r, _c)
    _row += _r
W_ROWS = _row                       # 688 — every slab starts on a bf16 (16,128) tile row

_V_ROW = {"s0": 0, "t0": 1, "s1": 2, "t1": 3, "s2": 4, "t2": 5, "s3": 6, "t3": 7,
          "sm": 8, "tm": 9, "ab1": 10, "aw2": 11, "fs": 12, "ft": 13, "fb": 14}
V_ROWS = 16


# -------------------------- single fused forward kernel --------------------------
def _fused_kernel(frames_ref, w_ref, v_ref, acts_ref, emb_ref):
    f32, bf16 = jnp.float32, jnp.bfloat16

    def wslab(name):
        off, rows, cols = _W_OFF[name]
        return w_ref[off:off + rows, :cols]          # (rows, cols) bf16, static slice

    def vrow(name, cols):
        r = _V_ROW[name]
        return v_ref[r:r + 1, :cols]                 # (1, cols) f32

    def conv_block(h, idx, residual):
        # h: (T, Cin) f32; weight slab: (K*Cin, Cout) bf16 — one MXU matmul per block.
        K, dil, _, cout = BLOCK_CFG[idx]
        t_len, cin = h.shape
        pad = (K - 1) * dil // 2
        z = jnp.zeros((PAD_ROWS, cin), f32)
        hp = jnp.concatenate([z, h, z], axis=0)      # sublane-aligned zero halo (in-kernel)
        base = PAD_ROWS - pad
        taps = [hp[base + k * dil: base + k * dil + t_len, :] for k in range(K)]
        xg = jnp.concatenate(taps, axis=1)           # (T, K*Cin) gathered operand
        acc = jnp.dot(xg.astype(bf16), wslab(f"w{idx}"), preferred_element_type=f32)
        y = jnp.maximum(acc, 0.0)                                     # ReLU
        y = y * vrow(f"s{idx}", cout) + vrow(f"t{idx}", cout)         # BN (inference affine)
        if residual:                                                  # SERes2Net-style skip
            # TODO(synk): Res2Net split + squeeze-excitation gating simplified to a
            # single dilated TDNN block with a residual connection.
            y = y + h
        return y

    bsz = frames_ref.shape[0]
    for b in range(bsz):                             # static unroll: whole batch, one launch
        # TODO(synk): real EncoderClassifier computes log-mel Fbank + mean/var norm; the
        # front-end here is non-overlapping framing + a fixed linear projection, which is
        # pre-folded into block0's conv weight (so it is absorbed into the first matmul).
        frames = frames_ref[b]                       # (T, FRAME_LEN) f32

        h0 = conv_block(frames, 0, residual=False)
        h1 = conv_block(h0, 1, residual=True)
        h2 = conv_block(h1, 2, residual=True)
        h3 = conv_block(h2, 3, residual=True)

        # hooked block activations: one lane-dense (T, 4*C = 128) store per batch item
        acts_ref[b] = jnp.concatenate([h0, h1, h2, h3], axis=1).astype(acts_ref.dtype)

        # ---- MFA: concat(block1..3) -> 1x1 conv + ReLU + BN ----
        cat = jnp.concatenate([h1, h2, h3], axis=1)                          # (T, 3C)
        hm = jnp.dot(cat.astype(bf16), wslab("wm"), preferred_element_type=f32)
        hm = jnp.maximum(hm, 0.0) * vrow("sm", C_MFA) + vrow("tm", C_MFA)    # (T, C_MFA)

        # ---- attentive statistics pooling ----
        e = jnp.tanh(jnp.dot(hm.astype(bf16), wslab("aw1"), preferred_element_type=f32)
                     + vrow("ab1", ATT_H))                                   # (T, ATT_H)
        logits = jnp.sum(e * vrow("aw2", ATT_H), axis=1, keepdims=True)      # (T, 1)
        logits = logits - jnp.max(logits, axis=0, keepdims=True)
        a = jnp.exp(logits)
        a = a * pl.reciprocal(jnp.sum(a, axis=0, keepdims=True), approx=True)  # softmax(T)
        mu = jnp.sum(a * hm, axis=0, keepdims=True)                          # (1, C_MFA)
        d = hm - mu
        var = jnp.sum(a * d * d, axis=0, keepdims=True)                      # two-pass (stable)
        sigma = jnp.sqrt(jnp.maximum(var, 1e-8))
        pooled = jnp.concatenate([mu, sigma], axis=1)                        # (1, 2*C_MFA)

        # ---- ASP BN affine + final FC (weights padded to lane-dense EMB_PAD) ----
        p = pooled * vrow("fs", 2 * C_MFA) + vrow("ft", 2 * C_MFA)
        emb = (jnp.dot(p.astype(bf16), wslab("fw"), preferred_element_type=f32)
               + vrow("fb", EMB_PAD))
        emb_ref[b:b + 1, :] = emb.astype(emb_ref.dtype)


# ----------------------------- parameter init -----------------------------
def _bn_affine(key, c):
    k1, k2, k3, k4 = jax.random.split(key, 4)
    gamma = 1.0 + 0.1 * jax.random.normal(k1, (1, c), jnp.float32)
    beta = 0.1 * jax.random.normal(k2, (1, c), jnp.float32)
    mean = 0.1 * jax.random.normal(k3, (1, c), jnp.float32)
    var = jnp.abs(jax.random.normal(k4, (1, c), jnp.float32)) + 1.0
    scale = gamma / jnp.sqrt(var + 1e-5)
    shift = beta - mean * scale
    return scale, shift


def _w(key, shape):
    fan_in = shape[-2] if len(shape) > 1 else shape[0]
    return jax.random.normal(key, shape, jnp.float32) / jnp.sqrt(float(fan_in))


def init_params(key):
    keys = jax.random.split(key, 16)
    feat_proj = _w(keys[0], (FRAME_LEN, N_FEATS))

    ws, vs = {}, {}
    for i, (k, d, cin, cout) in enumerate(BLOCK_CFG):
        kw, kb = jax.random.split(keys[1 + i])
        w = _w(kw, (k, cin, cout))                          # (K, Cin, Cout)
        if i == 0:
            # fold frame->feature projection into block0's conv taps:
            #   conv0(frames @ P) == gathered(frames) @ stack_k(P @ w0_k)
            w = jnp.einsum("fn,knc->kfc", feat_proj, w)     # (K, FRAME_LEN, Cout)
        ws[f"w{i}"] = w.reshape(-1, cout)
        vs[f"s{i}"], vs[f"t{i}"] = _bn_affine(kb, cout)

    kw, kb = jax.random.split(keys[6])
    ws["wm"] = _w(kw, (3 * C, C_MFA))
    vs["sm"], vs["tm"] = _bn_affine(kb, C_MFA)

    ws["aw1"] = _w(keys[7], (C_MFA, ATT_H))
    vs["ab1"] = 0.1 * jax.random.normal(keys[8], (1, ATT_H), jnp.float32)
    vs["aw2"] = _w(keys[9], (ATT_H, 1)).reshape(1, ATT_H)   # row vector: logits via VPU reduce

    vs["fs"], vs["ft"] = _bn_affine(keys[10], 2 * C_MFA)
    fw = jnp.zeros((2 * C_MFA, EMB_PAD), jnp.float32)
    ws["fw"] = fw.at[:, :EMB].set(_w(keys[11], (2 * C_MFA, EMB)))
    fb = jnp.zeros((1, EMB_PAD), jnp.float32)
    vs["fb"] = fb.at[:, :EMB].set(0.1 * jax.random.normal(keys[12], (1, EMB), jnp.float32))

    # pack: one bf16 weight slab + one f32 affine/bias slab (both lane-dense 128 wide)
    wpack = jnp.zeros((W_ROWS, LANES), jnp.float32)
    for name, (off, rows, cols) in _W_OFF.items():
        wpack = wpack.at[off:off + rows, :cols].set(ws[name])
    vpack = jnp.zeros((V_ROWS, LANES), jnp.float32)
    for name, row in _V_ROW.items():
        v = vs[name]
        vpack = vpack.at[row, : v.shape[-1]].set(v.reshape(-1))

    return {"wpack": wpack.astype(jnp.bfloat16), "vpack": vpack}


# ------------------------------ forward pass ------------------------------
def feature_extractor_forward(params, x):
    # x: [B, T_WAV] raw waveform
    bsz = x.shape[0]
    frames = x.reshape(bsz, T, FRAME_LEN)

    vmem = pl.BlockSpec(memory_space=pltpu.MemorySpace.VMEM)
    acts_all, emb_pad = pl.pallas_call(
        _fused_kernel,
        out_shape=(jax.ShapeDtypeStruct((bsz, T, 4 * C), jnp.float32),
                   jax.ShapeDtypeStruct((bsz, EMB_PAD), jnp.float32)),
        in_specs=[vmem, vmem, vmem],
        out_specs=(vmem, vmem),
    )(frames, params["wpack"], params["vpack"])

    emb = emb_pad[:, :EMB]
    # forward hook stores output[0] (first batch item), layout [T, C]
    activation = {str(i): acts_all[0, :, i * C:(i + 1) * C] for i in range(4)}
    y = emb[:, None, :]                 # speechbrain EncoderClassifier returns [B, 1, emb]
    return y, activation


if __name__ == "__main__":
    key = jax.random.PRNGKey(0)
    k_x, k_p = jax.random.split(key)
    x = jax.random.normal(k_x, (B, T_WAV), jnp.float32)
    params = init_params(k_p)

    y, acts = jax.jit(feature_extractor_forward)(params, x)
    y = jax.block_until_ready(y)
    acts = jax.tree_util.tree_map(jax.block_until_ready, acts)

    assert y.shape == (B, 1, EMB)
    assert set(acts.keys()) == {"0", "1", "2", "3"}
    assert acts["0"].shape == (T, C) and acts["3"].shape == (T, C)
    assert all(bool(jnp.isfinite(v).all()) for v in acts.values())
    assert bool(jnp.isfinite(y).all())
    print("KERNEL_OK")
</pallas_src>

<mosaic_0001>
module attributes {stable_mosaic.version = 11 : i64} {
  func.func @_fused_kernel(%arg0: memref<2x16x32xf32, #tpu.memory_space<vmem>>, %arg1: memref<688x128xbf16, #tpu.memory_space<vmem>>, %arg2: memref<16x128xf32, #tpu.memory_space<vmem>>, %arg3: memref<2x16x128xf32, #tpu.memory_space<vmem>>, %arg4: memref<2x128xf32, #tpu.memory_space<vmem>>) attributes {dimension_semantics = [], scalar_prefetch = 0 : i64, scratch_operands = 0 : i64, tpu.core_type = #tpu.core_type<tc>} {
    %c0 = arith.constant 0 : index
    %c0_0 = arith.constant 0 : index
    %c0_1 = arith.constant 0 : index
    %0 = vector.load %arg0[%c0, %c0_0, %c0_1] : memref<2x16x32xf32, #tpu.memory_space<vmem>>, vector<1x16x32xf32>
    %1 = vector.shape_cast %0 : vector<1x16x32xf32> to vector<16x32xf32>
    %cst = arith.constant 0.000000e+00 : f32
    %2 = vector.broadcast %cst : f32 to vector<8x32xf32>
    %3 = tpu.concatenate %2, %1, %2 in 0 : vector<8x32xf32>, vector<16x32xf32>, vector<8x32xf32> -> vector<32x32xf32>
    %4 = vector.extract_strided_slice %3 {offsets = [6, 0], sizes = [16, 32], strides = [1, 1]} : vector<32x32xf32> to vector<16x32xf32>
    %5 = vector.extract_strided_slice %3 {offsets = [7, 0], sizes = [16, 32], strides = [1, 1]} : vector<32x32xf32> to vector<16x32xf32>
    %6 = vector.extract_strided_slice %3 {offsets = [8, 0], sizes = [16, 32], strides = [1, 1]} : vector<32x32xf32> to vector<16x32xf32>
    %7 = vector.extract_strided_slice %3 {offsets = [9, 0], sizes = [16, 32], strides = [1, 1]} : vector<32x32xf32> to vector<16x32xf32>
    %8 = vector.extract_strided_slice %3 {offsets = [10, 0], sizes = [16, 32], strides = [1, 1]} : vector<32x32xf32> to vector<16x32xf32>
    %9 = tpu.concatenate %4, %5, %6, %7, %8 in 1 : vector<16x32xf32>, vector<16x32xf32>, vector<16x32xf32>, vector<16x32xf32>, vector<16x32xf32> -> vector<16x160xf32>
    %10 = arith.truncf %9 : vector<16x160xf32> to vector<16x160xbf16>
    %c0_2 = arith.constant 0 : index
    %c0_3 = arith.constant 0 : index
    %11 = vector.load %arg1[%c0_2, %c0_3] : memref<688x128xbf16, #tpu.memory_space<vmem>>, vector<160x32xbf16>
    %cst_4 = arith.constant dense<0.000000e+00> : vector<16x32xf32>
    %12 = tpu.matmul %10, %11, %cst_4 {dimension_numbers = #tpu.dot_dimension_numbers<[1], [0], [0], [1], [0, 0, 1, 1], [], []>} : vector<16x160xbf16>, vector<160x32xbf16>, vector<16x32xf32> -> vector<16x32xf32>
    %cst_5 = arith.constant 0.000000e+00 : f32
    %13 = vector.broadcast %cst_5 : f32 to vector<16x32xf32>
    %14 = arith.maximumf %12, %13 : vector<16x32xf32>
    %c0_6 = arith.constant 0 : index
    %c0_7 = arith.constant 0 : index
    %15 = vector.load %arg2[%c0_6, %c0_7] : memref<16x128xf32, #tpu.memory_space<vmem>>, vector<1x32xf32>
    %16 = vector.broadcast %15 : vector<1x32xf32> to vector<16x32xf32>
    %17 = arith.mulf %14, %16 : vector<16x32xf32>
    %c1 = arith.constant 1 : index
    %c0_8 = arith.constant 0 : index
    %18 = vector.load %arg2[%c1, %c0_8] : memref<16x128xf32, #tpu.memory_space<vmem>>, vector<1x32xf32>
    %19 = vector.broadcast %18 : vector<1x32xf32> to vector<16x32xf32>
    %20 = arith.addf %17, %19 : vector<16x32xf32>
    %cst_9 = arith.constant 0.000000e+00 : f32
    %21 = vector.broadcast %cst_9 : f32 to vector<8x32xf32>
    %22 = tpu.concatenate %21, %20, %21 in 0 : vector<8x32xf32>, vector<16x32xf32>, vector<8x32xf32> -> vector<32x32xf32>
    %23 = vector.extract_strided_slice %22 {offsets = [6, 0], sizes = [16, 32], strides = [1, 1]} : vector<32x32xf32> to vector<16x32xf32>
    %24 = vector.extract_strided_slice %22 {offsets = [8, 0], sizes = [16, 32], strides = [1, 1]} : vector<32x32xf32> to vector<16x32xf32>
    %25 = vector.extract_strided_slice %22 {offsets = [10, 0], sizes = [16, 32], strides = [1, 1]} : vector<32x32xf32> to vector<16x32xf32>
    %26 = tpu.concatenate %23, %24, %25 in 1 : vector<16x32xf32>, vector<16x32xf32>, vector<16x32xf32> -> vector<16x96xf32>
    %27 = arith.truncf %26 : vector<16x96xf32> to vector<16x96xbf16>
    %c160 = arith.constant 160 : index
    %c0_10 = arith.constant 0 : index
    %28 = vector.load %arg1[%c160, %c0_10] : memref<688x128xbf16, #tpu.memory_space<vmem>>, vector<96x32xbf16>
    %cst_11 = arith.constant dense<0.000000e+00> : vector<16x32xf32>
    %29 = tpu.matmul %27, %28, %cst_11 {dimension_numbers = #tpu.dot_dimension_numbers<[1], [0], [0], [1], [0, 0, 1, 1], [], []>} : vector<16x96xbf16>, vector<96x32xbf16>, vector<16x32xf32> -> vector<16x32xf32>
    %cst_12 = arith.constant 0.000000e+00 : f32
    %30 = vector.broadcast %cst_12 : f32 to vector<16x32xf32>
    %31 = arith.maximumf %29, %30 : vector<16x32xf32>
    %c2 = arith.constant 2 : index
    %c0_13 = arith.constant 0 : index
    %32 = vector.load %arg2[%c2, %c0_13] : memref<16x128xf32, #tpu.memory_space<vmem>>, vector<1x32xf32>
    %33 = vector.broadcast %32 : vector<1x32xf32> to vector<16x32xf32>
    %34 = arith.mulf %31, %33 : vector<16x32xf32>
    %c3 = arith.constant 3 : index
    %c0_14 = arith.constant 0 : index
    %35 = vector.load %arg2[%c3, %c0_14] : memref<16x128xf32, #tpu.memory_space<vmem>>, vector<1x32xf32>
    %36 = vector.broadcast %35 : vector<1x32xf32> to vector<16x32xf32>
    %37 = arith.addf %34, %36 : vector<16x32xf32>
    %38 = arith.addf %37, %20 : vector<16x32xf32>
    %cst_15 = arith.constant 0.000000e+00 : f32
    %39 = vector.broadcast %cst_15 : f32 to vector<8x32xf32>
    %40 = tpu.concatenate %39, %38, %39 in 0 : vector<8x32xf32>, vector<16x32xf32>, vector<8x32xf32> -> vector<32x32xf32>
    %41 = vector.extract_strided_slice %40 {offsets = [5, 0], sizes = [16, 32], strides = [1, 1]} : vector<32x32xf32> to vector<16x32xf32>
    %42 = vector.extract_strided_slice %40 {offsets = [8, 0], sizes = [16, 32], strides = [1, 1]} : vector<32x32xf32> to vector<16x32xf32>
    %43 = vector.extract_strided_slice %40 {offsets = [11, 0], sizes = [16, 32], strides = [1, 1]} : vector<32x32xf32> to vector<16x32xf32>
    %44 = tpu.concatenate %41, %42, %43 in 1 : vector<16x32xf32>, vector<16x32xf32>, vector<16x32xf32> -> vector<16x96xf32>
    %45 = arith.truncf %44 : vector<16x96xf32> to vector<16x96xbf16>
    %c256 = arith.constant 256 : index
    %c0_16 = arith.constant 0 : index
    %46 = vector.load %arg1[%c256, %c0_16] : memref<688x128xbf16, #tpu.memory_space<vmem>>, vector<96x32xbf16>
    %cst_17 = arith.constant dense<0.000000e+00> : vector<16x32xf32>
    %47 = tpu.matmul %45, %46, %cst_17 {dimension_numbers = #tpu.dot_dimension_numbers<[1], [0], [0], [1], [0, 0, 1, 1], [], []>} : vector<16x96xbf16>, vector<96x32xbf16>, vector<16x32xf32> -> vector<16x32xf32>
    %cst_18 = arith.constant 0.000000e+00 : f32
    %48 = vector.broadcast %cst_18 : f32 to vector<16x32xf32>
    %49 = arith.maximumf %47, %48 : vector<16x32xf32>
    %c4 = arith.constant 4 : index
    %c0_19 = arith.constant 0 : index
    %50 = vector.load %arg2[%c4, %c0_19] : memref<16x128xf32, #tpu.memory_space<vmem>>, vector<1x32xf32>
    %51 = vector.broadcast %50 : vector<1x32xf32> to vector<16x32xf32>
    %52 = arith.mulf %49, %51 : vector<16x32xf32>
    %c5 = arith.constant 5 : index
    %c0_20 = arith.constant 0 : index
    %53 = vector.load %arg2[%c5, %c0_20] : memref<16x128xf32, #tpu.memory_space<vmem>>, vector<1x32xf32>
    %54 = vector.broadcast %53 : vector<1x32xf32> to vector<16x32xf32>
    %55 = arith.addf %52, %54 : vector<16x32xf32>
    %56 = arith.addf %55, %38 : vector<16x32xf32>
    %cst_21 = arith.constant 0.000000e+00 : f32
    %57 = vector.broadcast %cst_21 : f32 to vector<8x32xf32>
    %58 = tpu.concatenate %57, %56, %57 in 0 : vector<8x32xf32>, vector<16x32xf32>, vector<8x32xf32> -> vector<32x32xf32>
    %59 = vector.extract_strided_slice %58 {offsets = [4, 0], sizes = [16, 32], strides = [1, 1]} : vector<32x32xf32> to vector<16x32xf32>
    %60 = vector.extract_strided_slice %58 {offsets = [8, 0], sizes = [16, 32], strides = [1, 1]} : vector<32x32xf32> to vector<16x32xf32>
    %61 = vector.extract_strided_slice %58 {offsets = [12, 0], sizes = [16, 32], strides = [1, 1]} : vector<32x32xf32> to vector<16x32xf32>
    %62 = tpu.concatenate %59, %60, %61 in 1 : vector<16x32xf32>, vector<16x32xf32>, vector<16x32xf32> -> vector<16x96xf32>
    %63 = arith.truncf %62 : vector<16x96xf32> to vector<16x96xbf16>
    %c352 = arith.constant 352 : index
    %c0_22 = arith.constant 0 : index
    %64 = vector.load %arg1[%c352, %c0_22] : memref<688x128xbf16, #tpu.memory_space<vmem>>, vector<96x32xbf16>
    %cst_23 = arith.constant dense<0.000000e+00> : vector<16x32xf32>
    %65 = tpu.matmul %63, %64, %cst_23 {dimension_numbers = #tpu.dot_dimension_numbers<[1], [0], [0], [1], [0, 0, 1, 1], [], []>} : vector<16x96xbf16>, vector<96x32xbf16>, vector<16x32xf32> -> vector<16x32xf32>
    %cst_24 = arith.constant 0.000000e+00 : f32
    %66 = vector.broadcast %cst_24 : f32 to vector<16x32xf32>
    %67 = arith.maximumf %65, %66 : vector<16x32xf32>
    %c6 = arith.constant 6 : index
    %c0_25 = arith.constant 0 : index
    %68 = vector.load %arg2[%c6, %c0_25] : memref<16x128xf32, #tpu.memory_space<vmem>>, vector<1x32xf32>
    %69 = vector.broadcast %68 : vector<1x32xf32> to vector<16x32xf32>
    %70 = arith.mulf %67, %69 : vector<16x32xf32>
    %c7 = arith.constant 7 : index
    %c0_26 = arith.constant 0 : index
    %71 = vector.load %arg2[%c7, %c0_26] : memref<16x128xf32, #tpu.memory_space<vmem>>, vector<1x32xf32>
    %72 = vector.broadcast %71 : vector<1x32xf32> to vector<16x32xf32>
    %73 = arith.addf %70, %72 : vector<16x32xf32>
    %74 = arith.addf %73, %56 : vector<16x32xf32>
    %75 = tpu.concatenate %20, %38, %56, %74 in 1 : vector<16x32xf32>, vector<16x32xf32>, vector<16x32xf32>, vector<16x32xf32> -> vector<16x128xf32>
    %c0_27 = arith.constant 0 : index
    %c0_28 = arith.constant 0 : index
    %c0_29 = arith.constant 0 : index
    %76 = vector.load %arg3[%c0_27, %c0_28, %c0_29] : memref<2x16x128xf32, #tpu.memory_space<vmem>>, vector<1x16x128xf32>
    %77 = vector.shape_cast %76 : vector<1x16x128xf32> to vector<16x128xf32>
    %78 = vector.shape_cast %75 : vector<16x128xf32> to vector<1x16x128xf32>
    tpu.vector_store %arg3[%c0_27, %c0_28, %c0_29], %78 {strides = array<i32>} : memref<2x16x128xf32, #tpu.memory_space<vmem>>, vector<1x16x128xf32>,
    %79 = tpu.concatenate %38, %56, %74 in 1 : vector<16x32xf32>, vector<16x32xf32>, vector<16x32xf32> -> vector<16x96xf32>
    %80 = arith.truncf %79 : vector<16x96xf32> to vector<16x96xbf16>
    %c448 = arith.constant 448 : index
    %c0_30 = arith.constant 0 : index
    %81 = vector.load %arg1[%c448, %c0_30] : memref<688x128xbf16, #tpu.memory_space<vmem>>, vector<96x48xbf16>
    %cst_31 = arith.constant dense<0.000000e+00> : vector<16x48xf32>
    %82 = tpu.matmul %80, %81, %cst_31 {dimension_numbers = #tpu.dot_dimension_numbers<[1], [0], [0], [1], [0, 0, 1, 1], [], []>} : vector<16x96xbf16>, vector<96x48xbf16>, vector<16x48xf32> -> vector<16x48xf32>
    %cst_32 = arith.constant 0.000000e+00 : f32
    %83 = vector.broadcast %cst_32 : f32 to vector<16x48xf32>
    %84 = arith.maximumf %82, %83 : vector<16x48xf32>
    %c8 = arith.constant 8 : index
    %c0_33 = arith.constant 0 : index
    %85 = vector.load %arg2[%c8, %c0_33] : memref<16x128xf32, #tpu.memory_space<vmem>>, vector<1x48xf32>
    %86 = vector.broadcast %85 : vector<1x48xf32> to vector<16x48xf32>
    %87 = arith.mulf %84, %86 : vector<16x48xf32>
    %c9 = arith.constant 9 : index
    %c0_34 = arith.constant 0 : index
    %88 = vector.load %arg2[%c9, %c0_34] : memref<16x128xf32, #tpu.memory_space<vmem>>, vector<1x48xf32>
    %89 = vector.broadcast %88 : vector<1x48xf32> to vector<16x48xf32>
    %90 = arith.addf %87, %89 : vector<16x48xf32>
    %91 = arith.truncf %90 : vector<16x48xf32> to vector<16x48xbf16>
    %c544 = arith.constant 544 : index
    %c0_35 = arith.constant 0 : index
    %92 = vector.load %arg1[%c544, %c0_35] : memref<688x128xbf16, #tpu.memory_space<vmem>>, vector<48x16xbf16>
    %cst_36 = arith.constant dense<0.000000e+00> : vector<16x16xf32>
    %93 = tpu.matmul %91, %92, %cst_36 {dimension_numbers = #tpu.dot_dimension_numbers<[1], [0], [0], [1], [0, 0, 1, 1], [], []>} : vector<16x48xbf16>, vector<48x16xbf16>, vector<16x16xf32> -> vector<16x16xf32>
    %c10 = arith.constant 10 : index
    %c0_37 = arith.constant 0 : index
    %94 = vector.load %arg2[%c10, %c0_37] : memref<16x128xf32, #tpu.memory_space<vmem>>, vector<1x16xf32>
    %95 = vector.broadcast %94 : vector<1x16xf32> to vector<16x16xf32>
    %96 = arith.addf %93, %95 : vector<16x16xf32>
    %97 = math.tanh %96 : vector<16x16xf32>
    %c11 = arith.constant 11 : index
    %c0_38 = arith.constant 0 : index
    %98 = vector.load %arg2[%c11, %c0_38] : memref<16x128xf32, #tpu.memory_space<vmem>>, vector<1x16xf32>
    %99 = vector.broadcast %98 : vector<1x16xf32> to vector<16x16xf32>
    %100 = arith.mulf %97, %99 : vector<16x16xf32>
    %cst_39 = arith.constant dense<0.000000e+00> : vector<16xf32>
    %101 = vector.multi_reduction <add>, %100, %cst_39 [1] : vector<16x16xf32> to vector<16xf32>
    %102 = vector.shape_cast %101 : vector<16xf32> to vector<16x1xf32>
    %cst_40 = arith.constant dense<0xFF800000> : vector<1xf32>
    %103 = vector.multi_reduction <maximumf>, %102, %cst_40 [0] : vector<16x1xf32> to vector<1xf32>
    %104 = vector.shape_cast %103 : vector<1xf32> to vector<1x1xf32>
    %105 = vector.broadcast %104 : vector<1x1xf32> to vector<16x1xf32>
    %106 = arith.subf %102, %105 : vector<16x1xf32>
    %107 = math.exp %106 : vector<16x1xf32>
    %cst_41 = arith.constant dense<0.000000e+00> : vector<1xf32>
    %108 = vector.multi_reduction <add>, %107, %cst_41 [0] : vector<16x1xf32> to vector<1xf32>
    %109 = vector.shape_cast %108 : vector<1xf32> to vector<1x1xf32>
    %110 = tpu.reciprocal %109 {approx = true} : vector<1x1xf32> -> vector<1x1xf32>
    %111 = vector.broadcast %110 : vector<1x1xf32> to vector<16x1xf32>
    %112 = arith.mulf %107, %111 : vector<16x1xf32>
    %113 = vector.broadcast %112 : vector<16x1xf32> to vector<16x48xf32>
    %114 = arith.mulf %113, %90 : vector<16x48xf32>
    %cst_42 = arith.constant dense<0.000000e+00> : vector<48xf32>
    %115 = vector.multi_reduction <add>, %114, %cst_42 [0] : vector<16x48xf32> to vector<48xf32>
    %116 = vector.shape_cast %115 : vector<48xf32> to vector<1x48xf32>
    %117 = vector.broadcast %116 : vector<1x48xf32> to vector<16x48xf32>
    %118 = arith.subf %90, %117 : vector<16x48xf32>
    %119 = vector.broadcast %112 : vector<16x1xf32> to vector<16x48xf32>
    %120 = arith.mulf %119, %118 : vector<16x48xf32>
    %121 = arith.mulf %120, %118 : vector<16x48xf32>
    %cst_43 = arith.constant dense<0.000000e+00> : vector<48xf32>
    %122 = vector.multi_reduction <add>, %121, %cst_43 [0] : vector<16x48xf32> to vector<48xf32>
    %123 = vector.shape_cast %122 : vector<48xf32> to vector<1x48xf32>
    %cst_44 = arith.constant 9.99999993E-9 : f32
    %124 = vector.broadcast %cst_44 : f32 to vector<1x48xf32>
    %125 = arith.maximumf %123, %124 : vector<1x48xf32>
    %126 = math.sqrt %125 : vector<1x48xf32>
    %127 = tpu.concatenate %116, %126 in 1 : vector<1x48xf32>, vector<1x48xf32> -> vector<1x96xf32>
    %c12 = arith.constant 12 : index
    %c0_45 = arith.constant 0 : index
    %128 = vector.load %arg2[%c12, %c0_45] : memref<16x128xf32, #tpu.memory_space<vmem>>, vector<1x96xf32>
    %129 = arith.mulf %127, %128 : vector<1x96xf32>
    %c13 = arith.constant 13 : index
    %c0_46 = arith.constant 0 : index
    %130 = vector.load %arg2[%c13, %c0_46] : memref<16x128xf32, #tpu.memory_space<vmem>>, vector<1x96xf32>
    %131 = arith.addf %129, %130 : vector<1x96xf32>
    %132 = arith.truncf %131 : vector<1x96xf32> to vector<1x96xbf16>
    %c592 = arith.constant 592 : index
    %c0_47 = arith.constant 0 : index
    %133 = vector.load %arg1[%c592, %c0_47] : memref<688x128xbf16, #tpu.memory_space<vmem>>, vector<96x128xbf16>
    %cst_48 = arith.constant dense<0.000000e+00> : vector<1x128xf32>
    %134 = tpu.matmul %132, %133, %cst_48 {dimension_numbers = #tpu.dot_dimension_numbers<[1], [0], [0], [1], [0, 0, 1, 1], [], []>} : vector<1x96xbf16>, vector<96x128xbf16>, vector<1x128xf32> -> vector<1x128xf32>
    %c14 = arith.constant 14 : index
    %c0_49 = arith.constant 0 : index
    %135 = vector.load %arg2[%c14, %c0_49] : memref<16x128xf32, #tpu.memory_space<vmem>>, vector<1x128xf32>
    %136 = arith.addf %134, %135 : vector<1x128xf32>
    %c0_50 = arith.constant 0 : index
    %c0_51 = arith.constant 0 : index
    %137 = vector.load %arg4[%c0_50, %c0_51] : memref<2x128xf32, #tpu.memory_space<vmem>>, vector<1x128xf32>
    tpu.vector_store %arg4[%c0_50, %c0_51], %136 {strides = array<i32>} : memref<2x128xf32, #tpu.memory_space<vmem>>, vector<1x128xf32>,
    %c1_52 = arith.constant 1 : index
    %c0_53 = arith.constant 0 : index
    %c0_54 = arith.constant 0 : index
    %138 = vector.load %arg0[%c1_52, %c0_53, %c0_54] : memref<2x16x32xf32, #tpu.memory_space<vmem>>, vector<1x16x32xf32>
    %139 = vector.shape_cast %138 : vector<1x16x32xf32> to vector<16x32xf32>
    %cst_55 = arith.constant 0.000000e+00 : f32
    %140 = vector.broadcast %cst_55 : f32 to vector<8x32xf32>
    %141 = tpu.concatenate %140, %139, %140 in 0 : vector<8x32xf32>, vector<16x32xf32>, vector<8x32xf32> -> vector<32x32xf32>
    %142 = vector.extract_strided_slice %141 {offsets = [6, 0], sizes = [16, 32], strides = [1, 1]} : vector<32x32xf32> to vector<16x32xf32>
    %143 = vector.extract_strided_slice %141 {offsets = [7, 0], sizes = [16, 32], strides = [1, 1]} : vector<32x32xf32> to vector<16x32xf32>
    %144 = vector.extract_strided_slice %141 {offsets = [8, 0], sizes = [16, 32], strides = [1, 1]} : vector<32x32xf32> to vector<16x32xf32>
    %145 = vector.extract_strided_slice %141 {offsets = [9, 0], sizes = [16, 32], strides = [1, 1]} : vector<32x32xf32> to vector<16x32xf32>
    %146 = vector.extract_strided_slice %141 {offsets = [10, 0], sizes = [16, 32], strides = [1, 1]} : vector<32x32xf32> to vector<16x32xf32>
    %147 = tpu.concatenate %142, %143, %144, %145, %146 in 1 : vector<16x32xf32>, vector<16x32xf32>, vector<16x32xf32>, vector<16x32xf32>, vector<16x32xf32> -> vector<16x160xf32>
    %148 = arith.truncf %147 : vector<16x160xf32> to vector<16x160xbf16>
    %c0_56 = arith.constant 0 : index
    %c0_57 = arith.constant 0 : index
    %149 = vector.load %arg1[%c0_56, %c0_57] : memref<688x128xbf16, #tpu.memory_space<vmem>>, vector<160x32xbf16>
    %cst_58 = arith.constant dense<0.000000e+00> : vector<16x32xf32>
    %150 = tpu.matmul %148, %149, %cst_58 {dimension_numbers = #tpu.dot_dimension_numbers<[1], [0], [0], [1], [0, 0, 1, 1], [], []>} : vector<16x160xbf16>, vector<160x32xbf16>, vector<16x32xf32> -> vector<16x32xf32>
    %cst_59 = arith.constant 0.000000e+00 : f32
    %151 = vector.broadcast %cst_59 : f32 to vector<16x32xf32>
    %152 = arith.maximumf %150, %151 : vector<16x32xf32>
    %c0_60 = arith.constant 0 : index
    %c0_61 = arith.constant 0 : index
    %153 = vector.load %arg2[%c0_60, %c0_61] : memref<16x128xf32, #tpu.memory_space<vmem>>, vector<1x32xf32>
    %154 = vector.broadcast %153 : vector<1x32xf32> to vector<16x32xf32>
    %155 = arith.mulf %152, %154 : vector<16x32xf32>
    %c1_62 = arith.constant 1 : index
    %c0_63 = arith.constant 0 : index
    %156 = vector.load %arg2[%c1_62, %c0_63] : memref<16x128xf32, #tpu.memory_space<vmem>>, vector<1x32xf32>
    %157 = vector.broadcast %156 : vector<1x32xf32> to vector<16x32xf32>
    %158 = arith.addf %155, %157 : vector<16x32xf32>
    %cst_64 = arith.constant 0.000000e+00 : f32
    %159 = vector.broadcast %cst_64 : f32 to vector<8x32xf32>
    %160 = tpu.concatenate %159, %158, %159 in 0 : vector<8x32xf32>, vector<16x32xf32>, vector<8x32xf32> -> vector<32x32xf32>
    %161 = vector.extract_strided_slice %160 {offsets = [6, 0], sizes = [16, 32], strides = [1, 1]} : vector<32x32xf32> to vector<16x32xf32>
    %162 = vector.extract_strided_slice %160 {offsets = [8, 0], sizes = [16, 32], strides = [1, 1]} : vector<32x32xf32> to vector<16x32xf32>
    %163 = vector.extract_strided_slice %160 {offsets = [10, 0], sizes = [16, 32], strides = [1, 1]} : vector<32x32xf32> to vector<16x32xf32>
    %164 = tpu.concatenate %161, %162, %163 in 1 : vector<16x32xf32>, vector<16x32xf32>, vector<16x32xf32> -> vector<16x96xf32>
    %165 = arith.truncf %164 : vector<16x96xf32> to vector<16x96xbf16>
    %c160_65 = arith.constant 160 : index
    %c0_66 = arith.constant 0 : index
    %166 = vector.load %arg1[%c160_65, %c0_66] : memref<688x128xbf16, #tpu.memory_space<vmem>>, vector<96x32xbf16>
    %cst_67 = arith.constant dense<0.000000e+00> : vector<16x32xf32>
    %167 = tpu.matmul %165, %166, %cst_67 {dimension_numbers = #tpu.dot_dimension_numbers<[1], [0], [0], [1], [0, 0, 1, 1], [], []>} : vector<16x96xbf16>, vector<96x32xbf16>, vector<16x32xf32> -> vector<16x32xf32>
    %cst_68 = arith.constant 0.000000e+00 : f32
    %168 = vector.broadcast %cst_68 : f32 to vector<16x32xf32>
    %169 = arith.maximumf %167, %168 : vector<16x32xf32>
    %c2_69 = arith.constant 2 : index
    %c0_70 = arith.constant 0 : index
    %170 = vector.load %arg2[%c2_69, %c0_70] : memref<16x128xf32, #tpu.memory_space<vmem>>, vector<1x32xf32>
    %171 = vector.broadcast %170 : vector<1x32xf32> to vector<16x32xf32>
    %172 = arith.mulf %169, %171 : vector<16x32xf32>
    %c3_71 = arith.constant 3 : index
    %c0_72 = arith.constant 0 : index
    %173 = vector.load %arg2[%c3_71, %c0_72] : memref<16x128xf32, #tpu.memory_space<vmem>>, vector<1x32xf32>
    %174 = vector.broadcast %173 : vector<1x32xf32> to vector<16x32xf32>
    %175 = arith.addf %172, %174 : vector<16x32xf32>
    %176 = arith.addf %175, %158 : vector<16x32xf32>
    %cst_73 = arith.constant 0.000000e+00 : f32
    %177 = vector.broadcast %cst_73 : f32 to vector<8x32xf32>
    %178 = tpu.concatenate %177, %176, %177 in 0 : vector<8x32xf32>, vector<16x32xf32>, vector<8x32xf32> -> vector<32x32xf32>
    %179 = vector.extract_strided_slice %178 {offsets = [5, 0], sizes = [16, 32], strides = [1, 1]} : vector<32x32xf32> to vector<16x32xf32>
    %180 = vector.extract_strided_slice %178 {offsets = [8, 0], sizes = [16, 32], strides = [1, 1]} : vector<32x32xf32> to vector<16x32xf32>
    %181 = vector.extract_strided_slice %178 {offsets = [11, 0], sizes = [16, 32], strides = [1, 1]} : vector<32x32xf32> to vector<16x32xf32>
    %182 = tpu.concatenate %179, %180, %181 in 1 : vector<16x32xf32>, vector<16x32xf32>, vector<16x32xf32> -> vector<16x96xf32>
    %183 = arith.truncf %182 : vector<16x96xf32> to vector<16x96xbf16>
    %c256_74 = arith.constant 256 : index
    %c0_75 = arith.constant 0 : index
    %184 = vector.load %arg1[%c256_74, %c0_75] : memref<688x128xbf16, #tpu.memory_space<vmem>>, vector<96x32xbf16>
    %cst_76 = arith.constant dense<0.000000e+00> : vector<16x32xf32>
    %185 = tpu.matmul %183, %184, %cst_76 {dimension_numbers = #tpu.dot_dimension_numbers<[1], [0], [0], [1], [0, 0, 1, 1], [], []>} : vector<16x96xbf16>, vector<96x32xbf16>, vector<16x32xf32> -> vector<16x32xf32>
    %cst_77 = arith.constant 0.000000e+00 : f32
    %186 = vector.broadcast %cst_77 : f32 to vector<16x32xf32>
    %187 = arith.maximumf %185, %186 : vector<16x32xf32>
    %c4_78 = arith.constant 4 : index
    %c0_79 = arith.constant 0 : index
    %188 = vector.load %arg2[%c4_78, %c0_79] : memref<16x128xf32, #tpu.memory_space<vmem>>, vector<1x32xf32>
    %189 = vector.broadcast %188 : vector<1x32xf32> to vector<16x32xf32>
    %190 = arith.mulf %187, %189 : vector<16x32xf32>
    %c5_80 = arith.constant 5 : index
    %c0_81 = arith.constant 0 : index
    %191 = vector.load %arg2[%c5_80, %c0_81] : memref<16x128xf32, #tpu.memory_space<vmem>>, vector<1x32xf32>
    %192 = vector.broadcast %191 : vector<1x32xf32> to vector<16x32xf32>
    %193 = arith.addf %190, %192 : vector<16x32xf32>
    %194 = arith.addf %193, %176 : vector<16x32xf32>
    %cst_82 = arith.constant 0.000000e+00 : f32
    %195 = vector.broadcast %cst_82 : f32 to vector<8x32xf32>
    %196 = tpu.concatenate %195, %194, %195 in 0 : vector<8x32xf32>, vector<16x32xf32>, vector<8x32xf32> -> vector<32x32xf32>
    %197 = vector.extract_strided_slice %196 {offsets = [4, 0], sizes = [16, 32], strides = [1, 1]} : vector<32x32xf32> to vector<16x32xf32>
    %198 = vector.extract_strided_slice %196 {offsets = [8, 0], sizes = [16, 32], strides = [1, 1]} : vector<32x32xf32> to vector<16x32xf32>
    %199 = vector.extract_strided_slice %196 {offsets = [12, 0], sizes = [16, 32], strides = [1, 1]} : vector<32x32xf32> to vector<16x32xf32>
    %200 = tpu.concatenate %197, %198, %199 in 1 : vector<16x32xf32>, vector<16x32xf32>, vector<16x32xf32> -> vector<16x96xf32>
    %201 = arith.truncf %200 : vector<16x96xf32> to vector<16x96xbf16>
    %c352_83 = arith.constant 352 : index
    %c0_84 = arith.constant 0 : index
    %202 = vector.load %arg1[%c352_83, %c0_84] : memref<688x128xbf16, #tpu.memory_space<vmem>>, vector<96x32xbf16>
    %cst_85 = arith.constant dense<0.000000e+00> : vector<16x32xf32>
    %203 = tpu.matmul %201, %202, %cst_85 {dimension_numbers = #tpu.dot_dimension_numbers<[1], [0], [0], [1], [0, 0, 1, 1], [], []>} : vector<16x96xbf16>, vector<96x32xbf16>, vector<16x32xf32> -> vector<16x32xf32>
    %cst_86 = arith.constant 0.000000e+00 : f32
    %204 = vector.broadcast %cst_86 : f32 to vector<16x32xf32>
    %205 = arith.maximumf %203, %204 : vector<16x32xf32>
    %c6_87 = arith.constant 6 : index
    %c0_88 = arith.constant 0 : index
    %206 = vector.load %arg2[%c6_87, %c0_88] : memref<16x128xf32, #tpu.memory_space<vmem>>, vector<1x32xf32>
    %207 = vector.broadcast %206 : vector<1x32xf32> to vector<16x32xf32>
    %208 = arith.mulf %205, %207 : vector<16x32xf32>
    %c7_89 = arith.constant 7 : index
    %c0_90 = arith.constant 0 : index
    %209 = vector.load %arg2[%c7_89, %c0_90] : memref<16x128xf32, #tpu.memory_space<vmem>>, vector<1x32xf32>
    %210 = vector.broadcast %209 : vector<1x32xf32> to vector<16x32xf32>
    %211 = arith.addf %208, %210 : vector<16x32xf32>
    %212 = arith.addf %211, %194 : vector<16x32xf32>
    %213 = tpu.concatenate %158, %176, %194, %212 in 1 : vector<16x32xf32>, vector<16x32xf32>, vector<16x32xf32>, vector<16x32xf32> -> vector<16x128xf32>
    %c1_91 = arith.constant 1 : index
    %c0_92 = arith.constant 0 : index
    %c0_93 = arith.constant 0 : index
    %214 = vector.load %arg3[%c1_91, %c0_92, %c0_93] : memref<2x16x128xf32, #tpu.memory_space<vmem>>, vector<1x16x128xf32>
    %215 = vector.shape_cast %214 : vector<1x16x128xf32> to vector<16x128xf32>
    %216 = vector.shape_cast %213 : vector<16x128xf32> to vector<1x16x128xf32>
    tpu.vector_store %arg3[%c1_91, %c0_92, %c0_93], %216 {strides = array<i32>} : memref<2x16x128xf32, #tpu.memory_space<vmem>>, vector<1x16x128xf32>,
    %217 = tpu.concatenate %176, %194, %212 in 1 : vector<16x32xf32>, vector<16x32xf32>, vector<16x32xf32> -> vector<16x96xf32>
    %218 = arith.truncf %217 : vector<16x96xf32> to vector<16x96xbf16>
    %c448_94 = arith.constant 448 : index
    %c0_95 = arith.constant 0 : index
    %219 = vector.load %arg1[%c448_94, %c0_95] : memref<688x128xbf16, #tpu.memory_space<vmem>>, vector<96x48xbf16>
    %cst_96 = arith.constant dense<0.000000e+00> : vector<16x48xf32>
    %220 = tpu.matmul %218, %219, %cst_96 {dimension_numbers = #tpu.dot_dimension_numbers<[1], [0], [0], [1], [0, 0, 1, 1], [], []>} : vector<16x96xbf16>, vector<96x48xbf16>, vector<16x48xf32> -> vector<16x48xf32>
    %cst_97 = arith.constant 0.000000e+00 : f32
    %221 = vector.broadcast %cst_97 : f32 to vector<16x48xf32>
    %222 = arith.maximumf %220, %221 : vector<16x48xf32>
    %c8_98 = arith.constant 8 : index
    %c0_99 = arith.constant 0 : index
    %223 = vector.load %arg2[%c8_98, %c0_99] : memref<16x128xf32, #tpu.memory_space<vmem>>, vector<1x48xf32>
    %224 = vector.broadcast %223 : vector<1x48xf32> to vector<16x48xf32>
    %225 = arith.mulf %222, %224 : vector<16x48xf32>
    %c9_100 = arith.constant 9 : index
    %c0_101 = arith.constant 0 : index
    %226 = vector.load %arg2[%c9_100, %c0_101] : memref<16x128xf32, #tpu.memory_space<vmem>>, vector<1x48xf32>
    %227 = vector.broadcast %226 : vector<1x48xf32> to vector<16x48xf32>
    %228 = arith.addf %225, %227 : vector<16x48xf32>
    %229 = arith.truncf %228 : vector<16x48xf32> to vector<16x48xbf16>
    %c544_102 = arith.constant 544 : index
    %c0_103 = arith.constant 0 : index
    %230 = vector.load %arg1[%c544_102, %c0_103] : memref<688x128xbf16, #tpu.memory_space<vmem>>, vector<48x16xbf16>
    %cst_104 = arith.constant dense<0.000000e+00> : vector<16x16xf32>
    %231 = tpu.matmul %229, %230, %cst_104 {dimension_numbers = #tpu.dot_dimension_numbers<[1], [0], [0], [1], [0, 0, 1, 1], [], []>} : vector<16x48xbf16>, vector<48x16xbf16>, vector<16x16xf32> -> vector<16x16xf32>
    %c10_105 = arith.constant 10 : index
    %c0_106 = arith.constant 0 : index
    %232 = vector.load %arg2[%c10_105, %c0_106] : memref<16x128xf32, #tpu.memory_space<vmem>>, vector<1x16xf32>
    %233 = vector.broadcast %232 : vector<1x16xf32> to vector<16x16xf32>
    %234 = arith.addf %231, %233 : vector<16x16xf32>
    %235 = math.tanh %234 : vector<16x16xf32>
    %c11_107 = arith.constant 11 : index
    %c0_108 = arith.constant 0 : index
    %236 = vector.load %arg2[%c11_107, %c0_108] : memref<16x128xf32, #tpu.memory_space<vmem>>, vector<1x16xf32>
    %237 = vector.broadcast %236 : vector<1x16xf32> to vector<16x16xf32>
    %238 = arith.mulf %235, %237 : vector<16x16xf32>
    %cst_109 = arith.constant dense<0.000000e+00> : vector<16xf32>
    %239 = vector.multi_reduction <add>, %238, %cst_109 [1] : vector<16x16xf32> to vector<16xf32>
    %240 = vector.shape_cast %239 : vector<16xf32> to vector<16x1xf32>
    %cst_110 = arith.constant dense<0xFF800000> : vector<1xf32>
    %241 = vector.multi_reduction <maximumf>, %240, %cst_110 [0] : vector<16x1xf32> to vector<1xf32>
    %242 = vector.shape_cast %241 : vector<1xf32> to vector<1x1xf32>
    %243 = vector.broadcast %242 : vector<1x1xf32> to vector<16x1xf32>
    %244 = arith.subf %240, %243 : vector<16x1xf32>
    %245 = math.exp %244 : vector<16x1xf32>
    %cst_111 = arith.constant dense<0.000000e+00> : vector<1xf32>
    %246 = vector.multi_reduction <add>, %245, %cst_111 [0] : vector<16x1xf32> to vector<1xf32>
    %247 = vector.shape_cast %246 : vector<1xf32> to vector<1x1xf32>
    %248 = tpu.reciprocal %247 {approx = true} : vector<1x1xf32> -> vector<1x1xf32>
    %249 = vector.broadcast %248 : vector<1x1xf32> to vector<16x1xf32>
    %250 = arith.mulf %245, %249 : vector<16x1xf32>
    %251 = vector.broadcast %250 : vector<16x1xf32> to vector<16x48xf32>
    %252 = arith.mulf %251, %228 : vector<16x48xf32>
    %cst_112 = arith.constant dense<0.000000e+00> : vector<48xf32>
    %253 = vector.multi_reduction <add>, %252, %cst_112 [0] : vector<16x48xf32> to vector<48xf32>
    %254 = vector.shape_cast %253 : vector<48xf32> to vector<1x48xf32>
    %255 = vector.broadcast %254 : vector<1x48xf32> to vector<16x48xf32>
    %256 = arith.subf %228, %255 : vector<16x48xf32>
    %257 = vector.broadcast %250 : vector<16x1xf32> to vector<16x48xf32>
    %258 = arith.mulf %257, %256 : vector<16x48xf32>
    %259 = arith.mulf %258, %256 : vector<16x48xf32>
    %cst_113 = arith.constant dense<0.000000e+00> : vector<48xf32>
    %260 = vector.multi_reduction <add>, %259, %cst_113 [0] : vector<16x48xf32> to vector<48xf32>
    %261 = vector.shape_cast %260 : vector<48xf32> to vector<1x48xf32>
    %cst_114 = arith.constant 9.99999993E-9 : f32
    %262 = vector.broadcast %cst_114 : f32 to vector<1x48xf32>
    %263 = arith.maximumf %261, %262 : vector<1x48xf32>
    %264 = math.sqrt %263 : vector<1x48xf32>
    %265 = tpu.concatenate %254, %264 in 1 : vector<1x48xf32>, vector<1x48xf32> -> vector<1x96xf32>
    %c12_115 = arith.constant 12 : index
    %c0_116 = arith.constant 0 : index
    %266 = vector.load %arg2[%c12_115, %c0_116] : memref<16x128xf32, #tpu.memory_space<vmem>>, vector<1x96xf32>
    %267 = arith.mulf %265, %266 : vector<1x96xf32>
    %c13_117 = arith.constant 13 : index
    %c0_118 = arith.constant 0 : index
    %268 = vector.load %arg2[%c13_117, %c0_118] : memref<16x128xf32, #tpu.memory_space<vmem>>, vector<1x96xf32>
    %269 = arith.addf %267, %268 : vector<1x96xf32>
    %270 = arith.truncf %269 : vector<1x96xf32> to vector<1x96xbf16>
    %c592_119 = arith.constant 592 : index
    %c0_120 = arith.constant 0 : index
    %271 = vector.load %arg1[%c592_119, %c0_120] : memref<688x128xbf16, #tpu.memory_space<vmem>>, vector<96x128xbf16>
    %cst_121 = arith.constant dense<0.000000e+00> : vector<1x128xf32>
    %272 = tpu.matmul %270, %271, %cst_121 {dimension_numbers = #tpu.dot_dimension_numbers<[1], [0], [0], [1], [0, 0, 1, 1], [], []>} : vector<1x96xbf16>, vector<96x128xbf16>, vector<1x128xf32> -> vector<1x128xf32>
    %c14_122 = arith.constant 14 : index
    %c0_123 = arith.constant 0 : index
    %273 = vector.load %arg2[%c14_122, %c0_123] : memref<16x128xf32, #tpu.memory_space<vmem>>, vector<1x128xf32>
    %274 = arith.addf %272, %273 : vector<1x128xf32>
    %c1_124 = arith.constant 1 : index
    %c0_125 = arith.constant 0 : index
    %275 = vector.load %arg4[%c1_124, %c0_125] : memref<2x128xf32, #tpu.memory_space<vmem>>, vector<1x128xf32>
    tpu.vector_store %arg4[%c1_124, %c0_125], %274 {strides = array<i32>} : memref<2x128xf32, #tpu.memory_space<vmem>>, vector<1x128xf32>,
    return
  }
}

</mosaic_0001>

<llo_original>
// kernel: feature_extractor_forward.1
$region0: #{feature_extractor_forward.1}
  #allocation0 [shape = 'u32[]', space=smem, size = 0x4, offset = 0x4, fixed_abs, tag = 'smem constant byte address 0x4 - core index']
  #allocation1 [shape = 'u32[72,128]{1,0:T(1,128)}', space=vmem, size = 0x9000, scoped, tag = 'internal scratch']
  %s0 = inlined_call_operand.vmem [shape: f32[2,16,32], index: 0, kind: input, shape index: {}]
  %s1 = inlined_call_operand.hbm [shape: bf16[688,128], index: 1, kind: input, shape index: {}]
  %s2 = inlined_call_operand.vmem [shape: f32[16,128], index: 2, kind: input, shape index: {}]
  %s3 = inlined_call_operand.vmem [shape: f32[2,16,128], index: 3, kind: output, shape index: {0}]
  %s4 = inlined_call_operand.hbm [shape: f32[2,128], index: 4, kind: output, shape index: {1}]
  %5 = xla_tuple %s3, %s4
  %s6 = sld [smem:[#allocation0]]
  $region34: #{feature_extractor_forward.1} parent=0
    _
  %s8 = ssub.s32 1, %s6
  %s9 = scalar_select 0, %s8, %s6
  $region1: #{feature_extractor_forward.1} parent=0
    #allocation2 [shape = 'u8[176128]{0}', space=vmem, size = 0x2b000, scoped, tag = 'input window, operand 1, single buffered']
    #allocation3 [shape = 's32[1]{0}', space=sflag, size = 0x4, scoped, tag = 'scoped memory for feature_extractor_forward.1']
    #allocation4 [shape = 's32[1]{0}', space=sflag, size = 0x4, scoped, tag = 'scoped memory for feature_extractor_forward.1']
    #allocation5 [shape = 'u8[1024]{0}', space=vmem, size = 0x400, scoped, tag = 'output window, operand 1, single buffered']
    %10 = vsyncpa [#allocation3], 0
    %11 = vsyncpa [#allocation4], 0
    // Predicated region
    $region2: #{feature_extractor_forward.1} parent=1 // pred_check
      _
    $region3: #{feature_extractor_forward.1} parent=1 // pred_check_branch
      %13 = sbr.rel (0) target = $region5
    $region4: #{feature_extractor_forward.1} parent=1 // pred_region
      _
    $region5: #{feature_extractor_forward.1} parent=1 // pred_fallthru
      _
    // Predicated region
    $region6: #{feature_extractor_forward.1} parent=1 // pred_check
      _
    $region7: #{feature_extractor_forward.1} parent=1 // pred_check_branch
      %15 = sbr.rel (0) target = $region9
    $region8: #{feature_extractor_forward.1} parent=1 // pred_region
      %17 = vsyncadd [#allocation3], 0
      %s18 = sshll.u32 %s1, 4
      %s19 = int_to_ptr.hbm [resolvable:$true] %s18
      %s20 = sshll.u32 [#allocation2], 4
      %s21 = int_to_ptr.vmem [resolvable:$true] %s20
      %26 = dma.hbm_to_vmem [thread:$0]  %s19, 5504, %s21, [#allocation3], 64, 64, 4
    $region9: #{feature_extractor_forward.1} parent=1 // pred_fallthru
      _
    // Predicated region
    $region10: #{feature_extractor_forward.1} parent=1 // pred_check
      _
    $region11: #{feature_extractor_forward.1} parent=1 // pred_check_branch
      %28 = sbr.rel (0) target = $region13
    $region12: #{feature_extractor_forward.1} parent=1 // pred_region
      _
    $region13: #{feature_extractor_forward.1} parent=1 // pred_fallthru
      _
    // Predicated region
    $region14: #{feature_extractor_forward.1} parent=1 // pred_check
      _
    $region15: #{feature_extractor_forward.1} parent=1 // pred_check_branch
      %30 = sbr.rel (0) target = $region17
    $region16: #{feature_extractor_forward.1} parent=1 // pred_region
      %32 = dma.done [#allocation3], 5504
    $region17: #{feature_extractor_forward.1} parent=1 // pred_fallthru
      _
    %v34 = vld [vmem:[%s0] sm:$0xff]
    %v35 = vld [vmem:[%s0 + $0x8] sm:$0xff]
    %vm39 = vcmask 1046528
    %v40 = vrot.slane 0.0, 1
    %v41 = vrot.slane %v34, 1
    %v42 = vsel %vm39, %v40, %v41
    %v43 = vrot.slane %v35, 1
    %v44 = vsel %vm39, %v41, %v43
    %45 = vrot.lane.b32.xlu0 %v42, 32
    %v46 = vpop.permute.xlu0 %45
    %47 = vrot.lane.b32.xlu0 %v44, 32
    %v48 = vpop.permute.xlu0 %47
    %49 = vrot.lane.b32.xlu0 %v43, 32
    %v50 = vpop.permute.xlu0 %49
    %vm54 = vcmask 1045504
    %v55 = vrot.slane %v34, 2
    %v56 = vrot.slane %v35, 2
    %v57 = vsel %vm54, %v55, %v56
    %58 = vrot.lane.b32.xlu0 %v55, 64
    %v59 = vpop.permute.xlu0 %58
    %60 = vrot.lane.b32.xlu0 %v57, 64
    %v61 = vpop.permute.xlu0 %60
    %62 = vrot.lane.b32.xlu0 %v56, 64
    %v63 = vpop.permute.xlu0 %62
    %vm67 = vcmask 1044480
    %v68 = vrot.slane %v34, 3
    %v69 = vrot.slane %v35, 3
    %v70 = vsel %vm67, %v68, %v69
    %v71 = vrot.slane 0.0, 3
    %v72 = vsel %vm67, %v69, %v71
    %73 = vrot.lane.b32.xlu0 %v68, 96
    %v74 = vpop.permute.xlu0 %73
    %75 = vrot.lane.b32.xlu0 %v70, 96
    %v76 = vpop.permute.xlu0 %75
    %77 = vrot.lane.b32.xlu0 %v72, 96
    %v78 = vpop.permute.xlu0 %77
    %vm82 = vcmask 1043456
    %v83 = vrot.slane %v34, 4
    %v84 = vrot.slane %v35, 4
    %v85 = vsel %vm82, %v83, %v84
    %v86 = vrot.slane 0.0, 4
    %v87 = vsel %vm82, %v84, %v86
    %vm91 = vcmask 261120
    %v92 = vsel %vm91, 0.0, %v46
    %v93 = vsel %vm91, %v34, %v48
    %v94 = vsel %vm91, %v35, %v50
    %vm95 = vcmask 523264
    %v96 = vsel %vm95, %v92, %v59
    %v97 = vsel %vm95, %v93, %v61
    %v98 = vsel %vm95, %v94, %v63
    %vm99 = vcmask 785408
    %v100 = vsel %vm99, %v96, %v74
    %v101 = vsel %vm99, %v97, %v76
    %v102 = vsel %vm99, %v98, %v78
    %v103 = vpack.c.bf16 %v101, %v100
    %v104 = vpack.c.bf16 %v85, %v83
    %v105 = vpack.c.bf16 %v102, %v102
    %v106 = vpack.c.bf16 %v87, %v87
    %v107 = vld [vmem:[#allocation2] sm:$0xf]
    %v108 = vld [vmem:[#allocation2 + $0x4] sm:$0xf]
    %v109 = vld [vmem:[#allocation2 + $0x8] sm:$0xf]
    %v110 = vld [vmem:[#allocation2 + $0xc] sm:$0xf]
    %v111 = vld [vmem:[#allocation2 + $0x10] sm:$0xf]
    %v112 = vld [vmem:[#allocation2 + $0x14] sm:$0xf]
    %v113 = vld [vmem:[#allocation2 + $0x18] sm:$0xf]
    %v114 = vld [vmem:[#allocation2 + $0x1c] sm:$0xf]
    %v115 = vld [vmem:[#allocation2 + $0x20] sm:$0xf]
    %v116 = vld [vmem:[#allocation2 + $0x24] sm:$0xf]
    %v117 = vld [vmem:[#allocation2 + $0x28] sm:$0xf]
    %v118 = vld [vmem:[#allocation2 + $0x2c] sm:$0xf]
    %v119 = vld [vmem:[#allocation2 + $0x30] sm:$0xf]
    %v120 = vld [vmem:[#allocation2 + $0x34] sm:$0xf]
    %v121 = vld [vmem:[#allocation2 + $0x38] sm:$0xf]
    %v122 = vld [vmem:[#allocation2 + $0x3c] sm:$0xf]
    %v123 = vld [vmem:[#allocation2 + $0x40] sm:$0xf]
    %v124 = vld [vmem:[#allocation2 + $0x44] sm:$0xf]
    %v125 = vld [vmem:[#allocation2 + $0x48] sm:$0xf]
    %v126 = vld [vmem:[#allocation2 + $0x4c] sm:$0xf]
    %vm131 = vcmask 1044480
    %v132 = vrot.slane %v103, 3
    %v133 = vrot.slane %v105, 3
    %v134 = vsel %vm131, %v132, %v133
    %v135 = vrot.slane %v104, 3
    %v136 = vrot.slane %v106, 3
    %v137 = vsel %vm131, %v135, %v136
    %v159 = vunpack.c.l.b16 %v107
    %v160 = vunpack.c.l.b16 %v108
    %v161 = vunpack.c.l.b16 %v109
    %v162 = vunpack.c.l.b16 %v110
    %v163 = vunpack.c.l.b16 %v111
    %v164 = vunpack.c.l.b16 %v112
    %v165 = vunpack.c.l.b16 %v113
    %v166 = vunpack.c.l.b16 %v114
    %v167 = vunpack.c.l.b16 %v115
    %v168 = vunpack.c.l.b16 %v116
    %v169 = vunpack.c.l.b16 %v117
    %v170 = vunpack.c.l.b16 %v118
    %v171 = vunpack.c.l.b16 %v119
    %v172 = vunpack.c.l.b16 %v120
    %v173 = vunpack.c.l.b16 %v121
    %v174 = vunpack.c.l.b16 %v122
    %v175 = vunpack.c.l.b16 %v123
    %v176 = vunpack.c.l.b16 %v124
    %v177 = vunpack.c.l.b16 %v125
    %v178 = vunpack.c.l.b16 %v126
    %v179 = vpack.c.b16 %v160, %v159
    %v180 = vpack.c.b16 %v162, %v161
    %v181 = vpack.c.b16 %v164, %v163
    %v182 = vpack.c.b16 %v166, %v165
    %v183 = vpack.c.b16 %v168, %v167
    %v184 = vpack.c.b16 %v170, %v169
    %v185 = vpack.c.b16 %v172, %v171
    %v186 = vpack.c.b16 %v174, %v173
    %v187 = vpack.c.b16 %v176, %v175
    %v188 = vpack.c.b16 %v178, %v177
    %v200 = vsel %vm91, %v137, 0
    %202 = vmatpush.bf16.msra.mxu0 %v186
    %203 = vmatpush.bf16.msra.mxu0 %v185
    %204 = vmatpush.bf16.msra.mxu0 %v184
    %205 = vmatpush.bf16.msra.mxu0 %v183
    %206 = vmatpush.bf16.msra.mxu0 %v182
    %207 = vmatpush.bf16.msra.mxu0 %v181
    %208 = vmatpush.bf16.msra.mxu0 %v180
    %209 = vmatpush.bf16.msra.mxu0 %v179
    %210 = vmatmul.bf16.gmra.mxu0 %v134
    %v211 = vpop.f32.mrf.mxu0
    %v212 = vadd.f32 0.0, %v211
    %v213 = vpop.f32.mrf.mxu0
    %v214 = vadd.f32 0.0, %v213
    %215 = vdwg.mxu0
    %216 = vmatpush.bf16.msra.mxu0 0
    %217 = vmatpush.bf16.msra.mxu0 0
    %218 = vmatpush.bf16.msra.mxu0 0
    %219 = vmatpush.bf16.msra.mxu0 0
    %220 = vmatpush.bf16.msra.mxu0 0
    %221 = vmatpush.bf16.msra.mxu0 0
    %222 = vmatpush.bf16.msra.mxu0 %v188
    %223 = vmatpush.bf16.msra.mxu0 %v187
    %224 = vmatmul.bf16.gmra.mxu0 %v200
    %v225 = vpop.f32.mrf.mxu0
    %v226 = vadd.f32 %v212, %v225
    %v227 = vpop.f32.mrf.mxu0
    %v228 = vadd.f32 %v214, %v227
    %229 = vdwg.mxu0
    %v230 = vmax.f32 %v226, 0.0
    %v231 = vmax.f32 %v228, 0.0
    %v232 = vld [vmem:[%s2] sm:$0x1]
    %v233 = vperm.slane %v232, 0
    %v234 = vmul.f32 %v230, %v233
    %v235 = vmul.f32 %v231, %v233
    %v236 = vld [vmem:[%s2 + $0x1] sm:$0x1]
    %v237 = vperm.slane %v236, 0
    %v238 = vadd.f32 %v234, %v237
    %v239 = vadd.f32 %v235, %v237
    %v242 = vrot.slane %v238, 2
    %v243 = vrot.slane %v239, 2
    %v244 = vsel %vm54, %v242, %v243
    %245 = vrot.lane.b32.xlu0 %v242, 32
    %v246 = vpop.permute.xlu0 %245
    %247 = vrot.lane.b32.xlu0 %v244, 32
    %v248 = vpop.permute.xlu0 %247
    %249 = vrot.lane.b32.xlu0 %v243, 32
    %v250 = vpop.permute.xlu0 %249
    %v254 = vrot.slane %v238, 4
    %v255 = vrot.slane %v239, 4
    %v256 = vsel %vm82, %v254, %v255
    %v257 = vsel %vm82, %v255, %v86
    %258 = vrot.lane.b32.xlu0 %v254, 64
    %v259 = vpop.permute.xlu0 %258
    %260 = vrot.lane.b32.xlu0 %v256, 64
    %v261 = vpop.permute.xlu0 %260
    %262 = vrot.lane.b32.xlu0 %v257, 64
    %v263 = vpop.permute.xlu0 %262
    %v267 = vsel %vm91, 0.0, %v246
    %v268 = vsel %vm91, %v238, %v248
    %v269 = vsel %vm91, %v239, %v250
    %v270 = vsel %vm95, %v267, %v259
    %v271 = vsel %vm95, %v268, %v261
    %v272 = vsel %vm95, %v269, %v263
    %v273 = vpack.c.bf16 %v271, %v270
    %v274 = vpack.c.bf16 %v272, %v272
    %v275 = vld [vmem:[#allocation2 + $0x50] sm:$0xf]
    %v276 = vld [vmem:[#allocation2 + $0x54] sm:$0xf]
    %v277 = vld [vmem:[#allocation2 + $0x58] sm:$0xf]
    %v278 = vld [vmem:[#allocation2 + $0x5c] sm:$0xf]
    %v279 = vld [vmem:[#allocation2 + $0x60] sm:$0xf]
    %v280 = vld [vmem:[#allocation2 + $0x64] sm:$0xf]
    %v281 = vld [vmem:[#allocation2 + $0x68] sm:$0xf]
    %v282 = vld [vmem:[#allocation2 + $0x6c] sm:$0xf]
    %v283 = vld [vmem:[#allocation2 + $0x70] sm:$0xf]
    %v284 = vld [vmem:[#allocation2 + $0x74] sm:$0xf]
    %v285 = vld [vmem:[#allocation2 + $0x78] sm:$0xf]
    %v286 = vld [vmem:[#allocation2 + $0x7c] sm:$0xf]
    %v289 = vrot.slane %v273, 3
    %v290 = vrot.slane %v274, 3
    %v291 = vsel %vm131, %v289, %v290
    %v304 = vunpack.c.l.b16 %v275
    %v305 = vunpack.c.l.b16 %v276
    %v306 = vunpack.c.l.b16 %v277
    %v307 = vunpack.c.l.b16 %v278
    %v308 = vunpack.c.l.b16 %v279
    %v309 = vunpack.c.l.b16 %v280
    %v310 = vunpack.c.l.b16 %v281
    %v311 = vunpack.c.l.b16 %v282
    %v312 = vunpack.c.l.b16 %v283
    %v313 = vunpack.c.l.b16 %v284
    %v314 = vunpack.c.l.b16 %v285
    %v315 = vunpack.c.l.b16 %v286
    %v316 = vpack.c.b16 %v305, %v304
    %v317 = vpack.c.b16 %v307, %v306
    %v318 = vpack.c.b16 %v309, %v308
    %v319 = vpack.c.b16 %v311, %v310
    %v320 = vpack.c.b16 %v313, %v312
    %v321 = vpack.c.b16 %v315, %v314
    %v329 = vsel %vm99, %v291, 0
    %331 = vmatpush.bf16.msra.mxu0 0
    %332 = vmatpush.bf16.msra.mxu0 0
    %333 = vmatpush.bf16.msra.mxu0 %v321
    %334 = vmatpush.bf16.msra.mxu0 %v320
    %335 = vmatpush.bf16.msra.mxu0 %v319
    %336 = vmatpush.bf16.msra.mxu0 %v318
    %337 = vmatpush.bf16.msra.mxu0 %v317
    %338 = vmatpush.bf16.msra.mxu0 %v316
    %339 = vmatmul.bf16.gmra.mxu0 %v329
    %v340 = vpop.f32.mrf.mxu0
    %v341 = vadd.f32 0.0, %v340
    %v342 = vpop.f32.mrf.mxu0
    %v343 = vadd.f32 0.0, %v342
    %344 = vdwg.mxu0
    %v345 = vmax.f32 %v341, 0.0
    %v346 = vmax.f32 %v343, 0.0
    %v347 = vld [vmem:[%s2 + $0x2] sm:$0x1]
    %v348 = vperm.slane %v347, 0
    %v349 = vmul.f32 %v345, %v348
    %v350 = vmul.f32 %v346, %v348
    %v351 = vld [vmem:[%s2 + $0x3] sm:$0x1]
    %v352 = vperm.slane %v351, 0
    %v353 = vadd.f32 %v349, %v352
    %v354 = vadd.f32 %v350, %v352
    %v355 = vadd.f32 %v353, %v238
    %v356 = vadd.f32 %v354, %v239
    %v359 = vrot.slane %v355, 3
    %v360 = vrot.slane %v356, 3
    %v361 = vsel %vm67, %v359, %v360
    %362 = vrot.lane.b32.xlu0 %v359, 32
    %v363 = vpop.permute.xlu0 %362
    %364 = vrot.lane.b32.xlu0 %v361, 32
    %v365 = vpop.permute.xlu0 %364
    %366 = vrot.lane.b32.xlu0 %v360, 32
    %v367 = vpop.permute.xlu0 %366
    %vm371 = vcmask 1041408
    %v372 = vrot.slane %v355, 6
    %v373 = vrot.slane %v356, 6
    %v374 = vsel %vm371, %v372, %v373
    %v375 = vrot.slane 0.0, 6
    %v376 = vsel %vm371, %v373, %v375
    %377 = vrot.lane.b32.xlu0 %v372, 64
    %v378 = vpop.permute.xlu0 %377
    %379 = vrot.lane.b32.xlu0 %v374, 64
    %v380 = vpop.permute.xlu0 %379
    %381 = vrot.lane.b32.xlu0 %v376, 64
    %v382 = vpop.permute.xlu0 %381
    %v386 = vsel %vm91, 0.0, %v363
    %v387 = vsel %vm91, %v355, %v365
    %v388 = vsel %vm91, %v356, %v367
    %v389 = vsel %vm95, %v386, %v378
    %v390 = vsel %vm95, %v387, %v380
    %v391 = vsel %vm95, %v388, %v382
    %v392 = vpack.c.bf16 %v390, %v389
    %v393 = vpack.c.bf16 %v391, %v391
    %v394 = vld [vmem:[#allocation2 + $0x80] sm:$0xf]
    %v395 = vld [vmem:[#allocation2 + $0x84] sm:$0xf]
    %v396 = vld [vmem:[#allocation2 + $0x88] sm:$0xf]
    %v397 = vld [vmem:[#allocation2 + $0x8c] sm:$0xf]
    %v398 = vld [vmem:[#allocation2 + $0x90] sm:$0xf]
    %v399 = vld [vmem:[#allocation2 + $0x94] sm:$0xf]
    %v400 = vld [vmem:[#allocation2 + $0x98] sm:$0xf]
    %v401 = vld [vmem:[#allocation2 + $0x9c] sm:$0xf]
    %v402 = vld [vmem:[#allocation2 + $0xa0] sm:$0xf]
    %v403 = vld [vmem:[#allocation2 + $0xa4] sm:$0xf]
    %v404 = vld [vmem:[#allocation2 + $0xa8] sm:$0xf]
    %v405 = vld [vmem:[#allocation2 + $0xac] sm:$0xf]
    %vm406 = vsmask.f32 5376
    %v408 = vshrl.u32 %v392, 16
    %v410 = vrot.slane %v408, 2
    %v411 = vshll.u32 %v392, 16
    %v413 = vrot.slane %v411, 3
    %v414 = vor.u32 %v410, %v413
    %v416 = vshrl.u32 %v393, 16
    %v418 = vrot.slane %v416, 2
    %v419 = vshll.u32 %v393, 16
    %v421 = vrot.slane %v419, 3
    %v422 = vor.u32 %v418, %v421
    %v423 = vsel %vm406, %v414, %v422
    %v436 = vunpack.c.l.b16 %v394
    %v437 = vunpack.c.l.b16 %v395
    %v438 = vunpack.c.l.b16 %v396
    %v439 = vunpack.c.l.b16 %v397
    %v440 = vunpack.c.l.b16 %v398
    %v441 = vunpack.c.l.b16 %v399
    %v442 = vunpack.c.l.b16 %v400
    %v443 = vunpack.c.l.b16 %v401
    %v444 = vunpack.c.l.b16 %v402
    %v445 = vunpack.c.l.b16 %v403
    %v446 = vunpack.c.l.b16 %v404
    %v447 = vunpack.c.l.b16 %v405
    %v448 = vpack.c.b16 %v437, %v436
    %v449 = vpack.c.b16 %v439, %v438
    %v450 = vpack.c.b16 %v441, %v440
    %v451 = vpack.c.b16 %v443, %v442
    %v452 = vpack.c.b16 %v445, %v444
    %v453 = vpack.c.b16 %v447, %v446
    %v461 = vsel %vm99, %v423, 0
    %463 = vmatpush.bf16.msra.mxu0 0
    %464 = vmatpush.bf16.msra.mxu0 0
    %465 = vmatpush.bf16.msra.mxu0 %v453
    %466 = vmatpush.bf16.msra.mxu0 %v452
    %467 = vmatpush.bf16.msra.mxu0 %v451
    %468 = vmatpush.bf16.msra.mxu0 %v450
    %469 = vmatpush.bf16.msra.mxu0 %v449
    %470 = vmatpush.bf16.msra.mxu0 %v448
    %471 = vmatmul.bf16.gmra.mxu0 %v461
    %v472 = vpop.f32.mrf.mxu0
    %v473 = vadd.f32 0.0, %v472
    %v474 = vpop.f32.mrf.mxu0
    %v475 = vadd.f32 0.0, %v474
    %476 = vdwg.mxu0
    %v477 = vmax.f32 %v473, 0.0
    %v478 = vmax.f32 %v475, 0.0
    %v479 = vld [vmem:[%s2 + $0x4] sm:$0x1]
    %v480 = vperm.slane %v479, 0
    %v481 = vmul.f32 %v477, %v480
    %v482 = vmul.f32 %v478, %v480
    %v483 = vld [vmem:[%s2 + $0x5] sm:$0x1]
    %v484 = vperm.slane %v483, 0
    %v485 = vadd.f32 %v481, %v484
    %v486 = vadd.f32 %v482, %v484
    %v487 = vadd.f32 %v485, %v355
    %v488 = vadd.f32 %v486, %v356
    %v491 = vrot.slane %v487, 4
    %v492 = vrot.slane %v488, 4
    %v493 = vsel %vm82, %v491, %v492
    %494 = vrot.lane.b32.xlu0 %v491, 32
    %v495 = vpop.permute.xlu0 %494
    %496 = vrot.lane.b32.xlu0 %v493, 32
    %v497 = vpop.permute.xlu0 %496
    %498 = vrot.lane.b32.xlu0 %v492, 32
    %v499 = vpop.permute.xlu0 %498
    %503 = vrot.lane.b32.xlu0 %v487, 64
    %v504 = vpop.permute.xlu0 %503
    %505 = vrot.lane.b32.xlu0 %v488, 64
    %v506 = vpop.permute.xlu0 %505
    %507 = vrot.lane.b32.xlu0 0.0, 64
    %v508 = vpop.permute.xlu0 %507
    %v512 = vsel %vm91, 0.0, %v495
    %v513 = vsel %vm91, %v487, %v497
    %v514 = vsel %vm91, %v488, %v499
    %v515 = vsel %vm95, %v512, %v504
    %v516 = vsel %vm95, %v513, %v506
    %v517 = vsel %vm95, %v514, %v508
    %v518 = vpack.c.bf16 %v516, %v515
    %v519 = vpack.c.bf16 %v517, %v517
    %v520 = vld [vmem:[#allocation2 + $0xb0] sm:$0xf]
    %v521 = vld [vmem:[#allocation2 + $0xb4] sm:$0xf]
    %v522 = vld [vmem:[#allocation2 + $0xb8] sm:$0xf]
    %v523 = vld [vmem:[#allocation2 + $0xbc] sm:$0xf]
    %v524 = vld [vmem:[#allocation2 + $0xc0] sm:$0xf]
    %v525 = vld [vmem:[#allocation2 + $0xc4] sm:$0xf]
    %v526 = vld [vmem:[#allocation2 + $0xc8] sm:$0xf]
    %v527 = vld [vmem:[#allocation2 + $0xcc] sm:$0xf]
    %v528 = vld [vmem:[#allocation2 + $0xd0] sm:$0xf]
    %v529 = vld [vmem:[#allocation2 + $0xd4] sm:$0xf]
    %v530 = vld [vmem:[#allocation2 + $0xd8] sm:$0xf]
    %v531 = vld [vmem:[#allocation2 + $0xdc] sm:$0xf]
    %vm534 = vcmask 1045504
    %v535 = vrot.slane %v518, 2
    %v536 = vrot.slane %v519, 2
    %v537 = vsel %vm534, %v535, %v536
    %v550 = vunpack.c.l.b16 %v520
    %v551 = vunpack.c.l.b16 %v521
    %v552 = vunpack.c.l.b16 %v522
    %v553 = vunpack.c.l.b16 %v523
    %v554 = vunpack.c.l.b16 %v524
    %v555 = vunpack.c.l.b16 %v525
    %v556 = vunpack.c.l.b16 %v526
    %v557 = vunpack.c.l.b16 %v527
    %v558 = vunpack.c.l.b16 %v528
    %v559 = vunpack.c.l.b16 %v529
    %v560 = vunpack.c.l.b16 %v530
    %v561 = vunpack.c.l.b16 %v531
    %v562 = vpack.c.b16 %v551, %v550
    %v563 = vpack.c.b16 %v553, %v552
    %v564 = vpack.c.b16 %v555, %v554
    %v565 = vpack.c.b16 %v557, %v556
    %v566 = vpack.c.b16 %v559, %v558
    %v567 = vpack.c.b16 %v561, %v560
    %v575 = vsel %vm99, %v537, 0
    %577 = vmatpush.bf16.msra.mxu0 0
    %578 = vmatpush.bf16.msra.mxu0 0
    %579 = vmatpush.bf16.msra.mxu0 %v567
    %580 = vmatpush.bf16.msra.mxu0 %v566
    %581 = vmatpush.bf16.msra.mxu0 %v565
    %582 = vmatpush.bf16.msra.mxu0 %v564
    %583 = vmatpush.bf16.msra.mxu0 %v563
    %584 = vmatpush.bf16.msra.mxu0 %v562
    %585 = vmatmul.bf16.gmra.mxu0 %v575
    %v586 = vpop.f32.mrf.mxu0
    %v587 = vadd.f32 0.0, %v586
    %v588 = vpop.f32.mrf.mxu0
    %v589 = vadd.f32 0.0, %v588
    %590 = vdwg.mxu0
    %v591 = vmax.f32 %v587, 0.0
    %v592 = vmax.f32 %v589, 0.0
    %v593 = vld [vmem:[%s2 + $0x6] sm:$0x1]
    %v594 = vperm.slane %v593, 0
    %v595 = vmul.f32 %v591, %v594
    %v596 = vmul.f32 %v592, %v594
    %v597 = vld [vmem:[%s2 + $0x7] sm:$0x1]
    %v598 = vperm.slane %v597, 0
    %v599 = vadd.f32 %v595, %v598
    %v600 = vadd.f32 %v596, %v598
    %v601 = vadd.f32 %v599, %v487
    %v602 = vadd.f32 %v600, %v488
    %603 = vrot.lane.b32.xlu0 %v355, 32
    %v604 = vpop.permute.xlu0 %603
    %605 = vrot.lane.b32.xlu0 %v356, 32
    %v606 = vpop.permute.xlu0 %605
    %611 = vrot.lane.b32.xlu0 %v601, 96
    %v612 = vpop.permute.xlu0 %611
    %613 = vrot.lane.b32.xlu0 %v602, 96
    %v614 = vpop.permute.xlu0 %613
    %v617 = vsel %vm91, %v238, %v604
    %v618 = vsel %vm91, %v239, %v606
    %v619 = vsel %vm95, %v617, %v504
    %v620 = vsel %vm95, %v618, %v506
    %v621 = vsel %vm99, %v619, %v612
    %v622 = vsel %vm99, %v620, %v614
    %623 = vst [vmem:[%s3] sm:$0xff] %v621
    %624 = vst [vmem:[%s3 + $0x8] sm:$0xff] %v622
    %625 = vrot.lane.b32.xlu0 %v487, 32
    %v626 = vpop.permute.xlu0 %625
    %627 = vrot.lane.b32.xlu0 %v488, 32
    %v628 = vpop.permute.xlu0 %627
    %631 = vrot.lane.b32.xlu0 %v601, 64
    %v632 = vpop.permute.xlu0 %631
    %633 = vrot.lane.b32.xlu0 %v602, 64
    %v634 = vpop.permute.xlu0 %633
    %v637 = vsel %vm91, %v355, %v626
    %v638 = vsel %vm91, %v356, %v628
    %v639 = vsel %vm95, %v637, %v632
    %v640 = vsel %vm95, %v638, %v634
    %v641 = vpack.c.bf16 %v640, %v639
    %v642 = vld [vmem:[#allocation2 + $0xe0] sm:$0xf]
    %v643 = vld [vmem:[#allocation2 + $0xe4] sm:$0xf]
    %v644 = vld [vmem:[#allocation2 + $0xe8] sm:$0xf]
    %v645 = vld [vmem:[#allocation2 + $0xec] sm:$0xf]
    %v646 = vld [vmem:[#allocation2 + $0xf0] sm:$0xf]
    %v647 = vld [vmem:[#allocation2 + $0xf4] sm:$0xf]
    %v648 = vld [vmem:[#allocation2 + $0xf8] sm:$0xf]
    %v649 = vld [vmem:[#allocation2 + $0xfc] sm:$0xf]
    %v650 = vld [vmem:[#allocation2 + $0x100] sm:$0xf]
    %v651 = vld [vmem:[#allocation2 + $0x104] sm:$0xf]
    %v652 = vld [vmem:[#allocation2 + $0x108] sm:$0xf]
    %v653 = vld [vmem:[#allocation2 + $0x10c] sm:$0xf]
    %v666 = vunpack.c.l.b16 %v642
    %v667 = vunpack.c.l.b16 %v643
    %v668 = vunpack.c.l.b16 %v644
    %v669 = vunpack.c.l.b16 %v645
    %v670 = vunpack.c.l.b16 %v646
    %v671 = vunpack.c.l.b16 %v647
    %v672 = vunpack.c.l.b16 %v648
    %v673 = vunpack.c.l.b16 %v649
    %v674 = vunpack.c.l.b16 %v650
    %v675 = vunpack.c.l.b16 %v651
    %v676 = vunpack.c.l.b16 %v652
    %v677 = vunpack.c.l.b16 %v653
    %v678 = vpack.c.b16 %v667, %v666
    %v679 = vpack.c.b16 %v669, %v668
    %v680 = vpack.c.b16 %v671, %v670
    %v681 = vpack.c.b16 %v673, %v672
    %v682 = vpack.c.b16 %v675, %v674
    %v683 = vpack.c.b16 %v677, %v676
    %v691 = vsel %vm99, %v641, 0
    %693 = vmatpush.bf16.msra.mxu0 0
    %694 = vmatpush.bf16.msra.mxu0 0
    %695 = vmatpush.bf16.msra.mxu0 %v683
    %696 = vmatpush.bf16.msra.mxu0 %v682
    %697 = vmatpush.bf16.msra.mxu0 %v681
    %698 = vmatpush.bf16.msra.mxu0 %v680
    %699 = vmatpush.bf16.msra.mxu0 %v679
    %700 = vmatpush.bf16.msra.mxu0 %v678
    %701 = vmatmul.bf16.gmra.mxu0 %v691
    %v702 = vpop.f32.mrf.mxu0
    %v703 = vadd.f32 0.0, %v702
    %v704 = vpop.f32.mrf.mxu0
    %v705 = vadd.f32 0.0, %v704
    %706 = vdwg.mxu0
    %v707 = vmax.f32 %v703, 0.0
    %v708 = vmax.f32 %v705, 0.0
    %v709 = vld [vmem:[%s2 + $0x8] sm:$0x1]
    %v710 = vperm.slane %v709, 0
    %v711 = vmul.f32 %v707, %v710
    %v712 = vmul.f32 %v708, %v710
    %v713 = vld [vmem:[%s2 + $0x9] sm:$0x1]
    %v714 = vperm.slane %v713, 0
    %v715 = vadd.f32 %v711, %v714
    %v716 = vadd.f32 %v712, %v714
    %v717 = vpack.c.bf16 %v716, %v715
    %v718 = vld [vmem:[#allocation2 + $0x110] sm:$0xf]
    %v719 = vld [vmem:[#allocation2 + $0x114] sm:$0xf]
    %v720 = vld [vmem:[#allocation2 + $0x118] sm:$0xf]
    %v721 = vld [vmem:[#allocation2 + $0x11c] sm:$0xf]
    %v722 = vld [vmem:[#allocation2 + $0x120] sm:$0xf]
    %v723 = vld [vmem:[#allocation2 + $0x124] sm:$0xf]
    %v724 = vld [vmem:[%s2 + $0xa] sm:$0x1]
    %v725 = vperm.slane %v724, 0
    %v732 = vunpack.c.l.b16 %v718
    %v733 = vunpack.c.l.b16 %v719
    %v734 = vunpack.c.l.b16 %v720
    %v735 = vunpack.c.l.b16 %v721
    %v736 = vunpack.c.l.b16 %v722
    %v737 = vunpack.c.l.b16 %v723
    %v738 = vpack.c.b16 %v733, %v732
    %v739 = vpack.c.b16 %v735, %v734
    %v740 = vpack.c.b16 %v737, %v736
    %vm744 = vcmask 392192
    %v746 = vsel %vm744, %v717, 0
    %748 = vmatpush.bf16.msra.mxu0 0
    %749 = vmatpush.bf16.msra.mxu0 0
    %750 = vmatpush.bf16.msra.mxu0 0
    %751 = vmatpush.bf16.msra.mxu0 0
    %752 = vmatpush.bf16.msra.mxu0 0
    %753 = vmatpush.bf16.msra.mxu0 %v740
    %754 = vmatpush.bf16.msra.mxu0 %v739
    %755 = vmatpush.bf16.msra.mxu0 %v738
    %756 = vmatmul.bf16.gmra.mxu0 %v746
    %v757 = vpop.f32.mrf.mxu0
    %v758 = vadd.f32 %v725, %v757
    %v759 = vpop.f32.mrf.mxu0
    %v760 = vadd.f32 %v725, %v759
    %761 = vdwg.mxu0
    %v762 = vtanh.pop %v758
    %v763 = vtanh.pop %v760
    %v764 = vld [vmem:[%s2 + $0xb] sm:$0x1]
    %v765 = vperm.slane %v764, 0
    %v766 = vmul.f32 %v762, %v765
    %v767 = vmul.f32 %v763, %v765
    %vm768 = vcmask 130048
    %v769 = vsel %vm768, %v766, 0.0
    %770 = vadd.xlane.f32.xlu0 %v769
    %v771 = vpop.xlane.xlu0 %770
    %v772 = vsel %vm768, %v767, 0.0
    %773 = vadd.xlane.f32.xlu0 %v772
    %v774 = vpop.xlane.xlu0 %773
    %v775 = vmax.f32 %v771, %v774
    %v776 = vrot.slane %v775, 4
    %v777 = vmax.f32 %v775, %v776
    %v778 = vrot.slane %v777, 2
    %v779 = vmax.f32 %v777, %v778
    %v780 = vrot.slane %v779, 1
    %v781 = vmax.f32 %v779, %v780
    %v782 = vsub.f32 %v771, %v781
    %v783 = vsub.f32 %v774, %v781
    %v784 = vmul.f32 %v782, 1.442695
    %v785 = vpow.pop %v784
    %v786 = vmul.f32 %v783, 1.442695
    %v787 = vpow.pop %v786
    %v788 = vadd.f32 %v785, %v787
    %v789 = vrot.slane %v788, 4
    %v790 = vadd.f32 %v788, %v789
    %v791 = vrot.slane %v790, 2
    %v792 = vadd.f32 %v790, %v791
    %v793 = vrot.slane %v792, 1
    %v794 = vadd.f32 %v792, %v793
    %v795 = vrcp.pop %v794
    %v796 = vmul.f32 %v785, %v795
    %v797 = vmul.f32 %v787, %v795
    %v798 = vmul.f32 %v796, %v715
    %v799 = vmul.f32 %v797, %v716
    %v800 = vsel %vm744, %v798, 0.0
    %v801 = vsel %vm744, %v799, 0.0
    %v802 = vadd.f32 %v800, %v801
    %v803 = vrot.slane %v802, 4
    %v804 = vadd.f32 %v802, %v803
    %v805 = vrot.slane %v804, 2
    %v806 = vadd.f32 %v804, %v805
    %v807 = vrot.slane %v806, 1
    %v808 = vadd.f32 %v806, %v807
    %v809 = vsub.f32 %v715, %v808
    %v810 = vsub.f32 %v716, %v808
    %v811 = vmul.f32 %v796, %v809
    %v812 = vmul.f32 %v797, %v810
    %v813 = vmul.f32 %v811, %v809
    %v814 = vmul.f32 %v812, %v810
    %v815 = vsel %vm744, %v813, 0.0
    %v816 = vsel %vm744, %v814, 0.0
    %v817 = vadd.f32 %v815, %v816
    %v818 = vrot.slane %v817, 4
    %v819 = vadd.f32 %v817, %v818
    %v820 = vrot.slane %v819, 2
    %v821 = vadd.f32 %v819, %v820
    %v822 = vrot.slane %v821, 1
    %v823 = vadd.f32 %v821, %v822
    %v824 = vmax.f32 %v823, 1e-08
    %v825 = vrsqrt.pop %v824
    %v826 = vmul.f32 %v825, %v824
    %v827 = vmul.f32 %v826, %v825
    %v828 = vmul.f32 0.5, %v827
    %v829 = vsub.f32 1.5, %v828
    %v830 = vmul.f32 %v825, %v829
    %v831 = vmul.f32 %v824, %v830
    %vm832 = vcmp.eq.f32.partialorder %v824, inf
    %v833 = vsel %vm832, %v824, %v831
    %vm834 = vcmp.eq.f32.partialorder %v824, 0.0
    %v835 = vand.u32 %v824, 2147483648
    %v836 = vsel %vm834, %v835, %v833
    %838 = vrot.lane.b32.xlu0 %v836, 48
    %v839 = vpop.permute.xlu0 %838
    %v841 = vsel %vm744, %v808, %v839
    %v842 = vld [vmem:[%s2 + $0xc] sm:$0x1]
    %v843 = vmul.f32 %v841, %v842
    %v844 = vld [vmem:[%s2 + $0xd] sm:$0x1]
    %v845 = vadd.f32 %v843, %v844
    %v846 = vpack.c.bf16 %v845, %v845
    %v847 = vld [vmem:[#allocation2 + $0x128] sm:$0xf]
    %v848 = vld [vmem:[#allocation2 + $0x12c] sm:$0xf]
    %v849 = vld [vmem:[#allocation2 + $0x130] sm:$0xf]
    %v850 = vld [vmem:[#allocation2 + $0x134] sm:$0xf]
    %v851 = vld [vmem:[#allocation2 + $0x138] sm:$0xf]
    %v852 = vld [vmem:[#allocation2 + $0x13c] sm:$0xf]
    %v853 = vld [vmem:[#allocation2 + $0x140] sm:$0xf]
    %v854 = vld [vmem:[#allocation2 + $0x144] sm:$0xf]
    %v855 = vld [vmem:[#allocation2 + $0x148] sm:$0xf]
    %v856 = vld [vmem:[#allocation2 + $0x14c] sm:$0xf]
    %v857 = vld [vmem:[#allocation2 + $0x150] sm:$0xf]
    %v858 = vld [vmem:[#allocation2 + $0x154] sm:$0xf]
    %v859 = vld [vmem:[%s2 + $0xe] sm:$0x1]
    %v872 = vunpack.c.l.b16 %v847
    %v873 = vunpack.c.l.b16 %v848
    %v874 = vunpack.c.l.b16 %v849
    %v875 = vunpack.c.l.b16 %v850
    %v876 = vunpack.c.l.b16 %v851
    %v877 = vunpack.c.l.b16 %v852
    %v878 = vunpack.c.l.b16 %v853
    %v879 = vunpack.c.l.b16 %v854
    %v880 = vunpack.c.l.b16 %v855
    %v881 = vunpack.c.l.b16 %v856
    %v882 = vunpack.c.l.b16 %v857
    %v883 = vunpack.c.l.b16 %v858
    %v884 = vpack.c.b16 %v873, %v872
    %v885 = vpack.c.b16 %v875, %v874
    %v886 = vpack.c.b16 %v877, %v876
    %v887 = vpack.c.b16 %v879, %v878
    %v888 = vpack.c.b16 %v881, %v880
    %v889 = vpack.c.b16 %v883, %v882
    %v897 = vsel %vm99, %v846, 0
    %899 = vmatpush.bf16.msra.mxu0 0
    %900 = vmatpush.bf16.msra.mxu0 0
    %901 = vmatpush.bf16.msra.mxu0 %v889
    %902 = vmatpush.bf16.msra.mxu0 %v888
    %903 = vmatpush.bf16.msra.mxu0 %v887
    %904 = vmatpush.bf16.msra.mxu0 %v886
    %905 = vmatpush.bf16.msra.mxu0 %v885
    %906 = vmatpush.bf16.msra.mxu0 %v884
    %907 = vmatmul.bf16.gmra.mxu0 %v897
    %v908 = vpop.f32.mrf.mxu0
    %v909 = vadd.f32 %v859, %v908
    %v910 = vpop.f32.mrf.mxu0
    %911 = vdwg.mxu0
    %912 = vst [vmem:[#allocation5] sm:$0x1] %v909
    %s913 = scalar_lea.vmem %s0, 16
    %v914 = vld [vmem:[%s913] sm:$0xff]
    %v915 = vld [vmem:[%s913 + $0x8] sm:$0xff]
    %v918 = vrot.slane %v914, 1
    %v919 = vsel %vm39, %v40, %v918
    %v920 = vrot.slane %v915, 1
    %v921 = vsel %vm39, %v918, %v920
    %922 = vrot.lane.b32.xlu0 %v919, 32
    %v923 = vpop.permute.xlu0 %922
    %924 = vrot.lane.b32.xlu0 %v921, 32
    %v925 = vpop.permute.xlu0 %924
    %926 = vrot.lane.b32.xlu0 %v920, 32
    %v927 = vpop.permute.xlu0 %926
    %v931 = vrot.slane %v914, 2
    %v932 = vrot.slane %v915, 2
    %v933 = vsel %vm54, %v931, %v932
    %934 = vrot.lane.b32.xlu0 %v931, 64
    %v935 = vpop.permute.xlu0 %934
    %936 = vrot.lane.b32.xlu0 %v933, 64
    %v937 = vpop.permute.xlu0 %936
    %938 = vrot.lane.b32.xlu0 %v932, 64
    %v939 = vpop.permute.xlu0 %938
    %v943 = vrot.slane %v914, 3
    %v944 = vrot.slane %v915, 3
    %v945 = vsel %vm67, %v943, %v944
    %v946 = vsel %vm67, %v944, %v71
    %947 = vrot.lane.b32.xlu0 %v943, 96
    %v948 = vpop.permute.xlu0 %947
    %949 = vrot.lane.b32.xlu0 %v945, 96
    %v950 = vpop.permute.xlu0 %949
    %951 = vrot.lane.b32.xlu0 %v946, 96
    %v952 = vpop.permute.xlu0 %951
    %v956 = vrot.slane %v914, 4
    %v957 = vrot.slane %v915, 4
    %v958 = vsel %vm82, %v956, %v957
    %v959 = vsel %vm82, %v957, %v86
    %v963 = vsel %vm91, 0.0, %v923
    %v964 = vsel %vm91, %v914, %v925
    %v965 = vsel %vm91, %v915, %v927
    %v966 = vsel %vm95, %v963, %v935
    %v967 = vsel %vm95, %v964, %v937
    %v968 = vsel %vm95, %v965, %v939
    %v969 = vsel %vm99, %v966, %v948
    %v970 = vsel %vm99, %v967, %v950
    %v971 = vsel %vm99, %v968, %v952
    %v972 = vpack.c.bf16 %v970, %v969
    %v973 = vpack.c.bf16 %v958, %v956
    %v974 = vpack.c.bf16 %v971, %v971
    %v975 = vpack.c.bf16 %v959, %v959
    %v976 = vld [vmem:[#allocation2] sm:$0xf]
    %v977 = vld [vmem:[#allocation2 + $0x4] sm:$0xf]
    %v978 = vld [vmem:[#allocation2 + $0x8] sm:$0xf]
    %v979 = vld [vmem:[#allocation2 + $0xc] sm:$0xf]
    %v980 = vld [vmem:[#allocation2 + $0x10] sm:$0xf]
    %v981 = vld [vmem:[#allocation2 + $0x14] sm:$0xf]
    %v982 = vld [vmem:[#allocation2 + $0x18] sm:$0xf]
    %v983 = vld [vmem:[#allocation2 + $0x1c] sm:$0xf]
    %v984 = vld [vmem:[#allocation2 + $0x20] sm:$0xf]
    %v985 = vld [vmem:[#allocation2 + $0x24] sm:$0xf]
    %v986 = vld [vmem:[#allocation2 + $0x28] sm:$0xf]
    %v987 = vld [vmem:[#allocation2 + $0x2c] sm:$0xf]
    %v988 = vld [vmem:[#allocation2 + $0x30] sm:$0xf]
    %v989 = vld [vmem:[#allocation2 + $0x34] sm:$0xf]
    %v990 = vld [vmem:[#allocation2 + $0x38] sm:$0xf]
    %v991 = vld [vmem:[#allocation2 + $0x3c] sm:$0xf]
    %v992 = vld [vmem:[#allocation2 + $0x40] sm:$0xf]
    %v993 = vld [vmem:[#allocation2 + $0x44] sm:$0xf]
    %v994 = vld [vmem:[#allocation2 + $0x48] sm:$0xf]
    %v995 = vld [vmem:[#allocation2 + $0x4c] sm:$0xf]
    %v1000 = vrot.slane %v972, 3
    %v1001 = vrot.slane %v974, 3
    %v1002 = vsel %vm131, %v1000, %v1001
    %v1003 = vrot.slane %v973, 3
    %v1004 = vrot.slane %v975, 3
    %v1005 = vsel %vm131, %v1003, %v1004
    %v1027 = vunpack.c.l.b16 %v976
    %v1028 = vunpack.c.l.b16 %v977
    %v1029 = vunpack.c.l.b16 %v978
    %v1030 = vunpack.c.l.b16 %v979
    %v1031 = vunpack.c.l.b16 %v980
    %v1032 = vunpack.c.l.b16 %v981
    %v1033 = vunpack.c.l.b16 %v982
    %v1034 = vunpack.c.l.b16 %v983
    %v1035 = vunpack.c.l.b16 %v984
    %v1036 = vunpack.c.l.b16 %v985
    %v1037 = vunpack.c.l.b16 %v986
    %v1038 = vunpack.c.l.b16 %v987
    %v1039 = vunpack.c.l.b16 %v988
    %v1040 = vunpack.c.l.b16 %v989
    %v1041 = vunpack.c.l.b16 %v990
    %v1042 = vunpack.c.l.b16 %v991
    %v1043 = vunpack.c.l.b16 %v992
    %v1044 = vunpack.c.l.b16 %v993
    %v1045 = vunpack.c.l.b16 %v994
    %v1046 = vunpack.c.l.b16 %v995
    %v1047 = vpack.c.b16 %v1028, %v1027
    %v1048 = vpack.c.b16 %v1030, %v1029
    %v1049 = vpack.c.b16 %v1032, %v1031
    %v1050 = vpack.c.b16 %v1034, %v1033
    %v1051 = vpack.c.b16 %v1036, %v1035
    %v1052 = vpack.c.b16 %v1038, %v1037
    %v1053 = vpack.c.b16 %v1040, %v1039
    %v1054 = vpack.c.b16 %v1042, %v1041
    %v1055 = vpack.c.b16 %v1044, %v1043
    %v1056 = vpack.c.b16 %v1046, %v1045
    %v1068 = vsel %vm91, %v1005, 0
    %1070 = vmatpush.bf16.msra.mxu0 %v1054
    %1071 = vmatpush.bf16.msra.mxu0 %v1053
    %1072 = vmatpush.bf16.msra.mxu0 %v1052
    %1073 = vmatpush.bf16.msra.mxu0 %v1051
    %1074 = vmatpush.bf16.msra.mxu0 %v1050
    %1075 = vmatpush.bf16.msra.mxu0 %v1049
    %1076 = vmatpush.bf16.msra.mxu0 %v1048
    %1077 = vmatpush.bf16.msra.mxu0 %v1047
    %1078 = vmatmul.bf16.gmra.mxu0 %v1002
    %v1079 = vpop.f32.mrf.mxu0
    %v1080 = vadd.f32 0.0, %v1079
    %v1081 = vpop.f32.mrf.mxu0
    %v1082 = vadd.f32 0.0, %v1081
    %1083 = vdwg.mxu0
    %1084 = vmatpush.bf16.msra.mxu0 0
    %1085 = vmatpush.bf16.msra.mxu0 0
    %1086 = vmatpush.bf16.msra.mxu0 0
    %1087 = vmatpush.bf16.msra.mxu0 0
    %1088 = vmatpush.bf16.msra.mxu0 0
    %1089 = vmatpush.bf16.msra.mxu0 0
    %1090 = vmatpush.bf16.msra.mxu0 %v1056
    %1091 = vmatpush.bf16.msra.mxu0 %v1055
    %1092 = vmatmul.bf16.gmra.mxu0 %v1068
    %v1093 = vpop.f32.mrf.mxu0
    %v1094 = vadd.f32 %v1080, %v1093
    %v1095 = vpop.f32.mrf.mxu0
    %v1096 = vadd.f32 %v1082, %v1095
    %1097 = vdwg.mxu0
    %v1098 = vmax.f32 %v1094, 0.0
    %v1099 = vmax.f32 %v1096, 0.0
    %v1100 = vld [vmem:[%s2] sm:$0x1]
    %v1101 = vperm.slane %v1100, 0
    %v1102 = vmul.f32 %v1098, %v1101
    %v1103 = vmul.f32 %v1099, %v1101
    %v1104 = vld [vmem:[%s2 + $0x1] sm:$0x1]
    %v1105 = vperm.slane %v1104, 0
    %v1106 = vadd.f32 %v1102, %v1105
    %v1107 = vadd.f32 %v1103, %v1105
    %v1110 = vrot.slane %v1106, 2
    %v1111 = vrot.slane %v1107, 2
    %v1112 = vsel %vm54, %v1110, %v1111
    %1113 = vrot.lane.b32.xlu0 %v1110, 32
    %v1114 = vpop.permute.xlu0 %1113
    %1115 = vrot.lane.b32.xlu0 %v1112, 32
    %v1116 = vpop.permute.xlu0 %1115
    %1117 = vrot.lane.b32.xlu0 %v1111, 32
    %v1118 = vpop.permute.xlu0 %1117
    %v1122 = vrot.slane %v1106, 4
    %v1123 = vrot.slane %v1107, 4
    %v1124 = vsel %vm82, %v1122, %v1123
    %v1125 = vsel %vm82, %v1123, %v86
    %1126 = vrot.lane.b32.xlu0 %v1122, 64
    %v1127 = vpop.permute.xlu0 %1126
    %1128 = vrot.lane.b32.xlu0 %v1124, 64
    %v1129 = vpop.permute.xlu0 %1128
    %1130 = vrot.lane.b32.xlu0 %v1125, 64
    %v1131 = vpop.permute.xlu0 %1130
    %v1135 = vsel %vm91, 0.0, %v1114
    %v1136 = vsel %vm91, %v1106, %v1116
    %v1137 = vsel %vm91, %v1107, %v1118
    %v1138 = vsel %vm95, %v1135, %v1127
    %v1139 = vsel %vm95, %v1136, %v1129
    %v1140 = vsel %vm95, %v1137, %v1131
    %v1141 = vpack.c.bf16 %v1139, %v1138
    %v1142 = vpack.c.bf16 %v1140, %v1140
    %v1143 = vld [vmem:[#allocation2 + $0x50] sm:$0xf]
    %v1144 = vld [vmem:[#allocation2 + $0x54] sm:$0xf]
    %v1145 = vld [vmem:[#allocation2 + $0x58] sm:$0xf]
    %v1146 = vld [vmem:[#allocation2 + $0x5c] sm:$0xf]
    %v1147 = vld [vmem:[#allocation2 + $0x60] sm:$0xf]
    %v1148 = vld [vmem:[#allocation2 + $0x64] sm:$0xf]
    %v1149 = vld [vmem:[#allocation2 + $0x68] sm:$0xf]
    %v1150 = vld [vmem:[#allocation2 + $0x6c] sm:$0xf]
    %v1151 = vld [vmem:[#allocation2 + $0x70] sm:$0xf]
    %v1152 = vld [vmem:[#allocation2 + $0x74] sm:$0xf]
    %v1153 = vld [vmem:[#allocation2 + $0x78] sm:$0xf]
    %v1154 = vld [vmem:[#allocation2 + $0x7c] sm:$0xf]
    %v1157 = vrot.slane %v1141, 3
    %v1158 = vrot.slane %v1142, 3
    %v1159 = vsel %vm131, %v1157, %v1158
    %v1172 = vunpack.c.l.b16 %v1143
    %v1173 = vunpack.c.l.b16 %v1144
    %v1174 = vunpack.c.l.b16 %v1145
    %v1175 = vunpack.c.l.b16 %v1146
    %v1176 = vunpack.c.l.b16 %v1147
    %v1177 = vunpack.c.l.b16 %v1148
    %v1178 = vunpack.c.l.b16 %v1149
    %v1179 = vunpack.c.l.b16 %v1150
    %v1180 = vunpack.c.l.b16 %v1151
    %v1181 = vunpack.c.l.b16 %v1152
    %v1182 = vunpack.c.l.b16 %v1153
    %v1183 = vunpack.c.l.b16 %v1154
    %v1184 = vpack.c.b16 %v1173, %v1172
    %v1185 = vpack.c.b16 %v1175, %v1174
    %v1186 = vpack.c.b16 %v1177, %v1176
    %v1187 = vpack.c.b16 %v1179, %v1178
    %v1188 = vpack.c.b16 %v1181, %v1180
    %v1189 = vpack.c.b16 %v1183, %v1182
    %v1197 = vsel %vm99, %v1159, 0
    %1199 = vmatpush.bf16.msra.mxu0 0
    %1200 = vmatpush.bf16.msra.mxu0 0
    %1201 = vmatpush.bf16.msra.mxu0 %v1189
    %1202 = vmatpush.bf16.msra.mxu0 %v1188
    %1203 = vmatpush.bf16.msra.mxu0 %v1187
    %1204 = vmatpush.bf16.msra.mxu0 %v1186
    %1205 = vmatpush.bf16.msra.mxu0 %v1185
    %1206 = vmatpush.bf16.msra.mxu0 %v1184
    %1207 = vmatmul.bf16.gmra.mxu0 %v1197
    %v1208 = vpop.f32.mrf.mxu0
    %v1209 = vadd.f32 0.0, %v1208
    %v1210 = vpop.f32.mrf.mxu0
    %v1211 = vadd.f32 0.0, %v1210
    %1212 = vdwg.mxu0
    %v1213 = vmax.f32 %v1209, 0.0
    %v1214 = vmax.f32 %v1211, 0.0
    %v1215 = vld [vmem:[%s2 + $0x2] sm:$0x1]
    %v1216 = vperm.slane %v1215, 0
    %v1217 = vmul.f32 %v1213, %v1216
    %v1218 = vmul.f32 %v1214, %v1216
    %v1219 = vld [vmem:[%s2 + $0x3] sm:$0x1]
    %v1220 = vperm.slane %v1219, 0
    %v1221 = vadd.f32 %v1217, %v1220
    %v1222 = vadd.f32 %v1218, %v1220
    %v1223 = vadd.f32 %v1221, %v1106
    %v1224 = vadd.f32 %v1222, %v1107
    %v1227 = vrot.slane %v1223, 3
    %v1228 = vrot.slane %v1224, 3
    %v1229 = vsel %vm67, %v1227, %v1228
    %1230 = vrot.lane.b32.xlu0 %v1227, 32
    %v1231 = vpop.permute.xlu0 %1230
    %1232 = vrot.lane.b32.xlu0 %v1229, 32
    %v1233 = vpop.permute.xlu0 %1232
    %1234 = vrot.lane.b32.xlu0 %v1228, 32
    %v1235 = vpop.permute.xlu0 %1234
    %v1239 = vrot.slane %v1223, 6
    %v1240 = vrot.slane %v1224, 6
    %v1241 = vsel %vm371, %v1239, %v1240
    %v1242 = vsel %vm371, %v1240, %v375
    %1243 = vrot.lane.b32.xlu0 %v1239, 64
    %v1244 = vpop.permute.xlu0 %1243
    %1245 = vrot.lane.b32.xlu0 %v1241, 64
    %v1246 = vpop.permute.xlu0 %1245
    %1247 = vrot.lane.b32.xlu0 %v1242, 64
    %v1248 = vpop.permute.xlu0 %1247
    %v1252 = vsel %vm91, 0.0, %v1231
    %v1253 = vsel %vm91, %v1223, %v1233
    %v1254 = vsel %vm91, %v1224, %v1235
    %v1255 = vsel %vm95, %v1252, %v1244
    %v1256 = vsel %vm95, %v1253, %v1246
    %v1257 = vsel %vm95, %v1254, %v1248
    %v1258 = vpack.c.bf16 %v1256, %v1255
    %v1259 = vpack.c.bf16 %v1257, %v1257
    %v1260 = vld [vmem:[#allocation2 + $0x80] sm:$0xf]
    %v1261 = vld [vmem:[#allocation2 + $0x84] sm:$0xf]
    %v1262 = vld [vmem:[#allocation2 + $0x88] sm:$0xf]
    %v1263 = vld [vmem:[#allocation2 + $0x8c] sm:$0xf]
    %v1264 = vld [vmem:[#allocation2 + $0x90] sm:$0xf]
    %v1265 = vld [vmem:[#allocation2 + $0x94] sm:$0xf]
    %v1266 = vld [vmem:[#allocation2 + $0x98] sm:$0xf]
    %v1267 = vld [vmem:[#allocation2 + $0x9c] sm:$0xf]
    %v1268 = vld [vmem:[#allocation2 + $0xa0] sm:$0xf]
    %v1269 = vld [vmem:[#allocation2 + $0xa4] sm:$0xf]
    %v1270 = vld [vmem:[#allocation2 + $0xa8] sm:$0xf]
    %v1271 = vld [vmem:[#allocation2 + $0xac] sm:$0xf]
    %v1273 = vshrl.u32 %v1258, 16
    %v1275 = vrot.slane %v1273, 2
    %v1276 = vshll.u32 %v1258, 16
    %v1278 = vrot.slane %v1276, 3
    %v1279 = vor.u32 %v1275, %v1278
    %v1281 = vshrl.u32 %v1259, 16
    %v1283 = vrot.slane %v1281, 2
    %v1284 = vshll.u32 %v1259, 16
    %v1286 = vrot.slane %v1284, 3
    %v1287 = vor.u32 %v1283, %v1286
    %v1288 = vsel %vm406, %v1279, %v1287
    %v1301 = vunpack.c.l.b16 %v1260
    %v1302 = vunpack.c.l.b16 %v1261
    %v1303 = vunpack.c.l.b16 %v1262
    %v1304 = vunpack.c.l.b16 %v1263
    %v1305 = vunpack.c.l.b16 %v1264
    %v1306 = vunpack.c.l.b16 %v1265
    %v1307 = vunpack.c.l.b16 %v1266
    %v1308 = vunpack.c.l.b16 %v1267
    %v1309 = vunpack.c.l.b16 %v1268
    %v1310 = vunpack.c.l.b16 %v1269
    %v1311 = vunpack.c.l.b16 %v1270
    %v1312 = vunpack.c.l.b16 %v1271
    %v1313 = vpack.c.b16 %v1302, %v1301
    %v1314 = vpack.c.b16 %v1304, %v1303
    %v1315 = vpack.c.b16 %v1306, %v1305
    %v1316 = vpack.c.b16 %v1308, %v1307
    %v1317 = vpack.c.b16 %v1310, %v1309
    %v1318 = vpack.c.b16 %v1312, %v1311
    %v1326 = vsel %vm99, %v1288, 0
    %1328 = vmatpush.bf16.msra.mxu0 0
    %1329 = vmatpush.bf16.msra.mxu0 0
    %1330 = vmatpush.bf16.msra.mxu0 %v1318
    %1331 = vmatpush.bf16.msra.mxu0 %v1317
    %1332 = vmatpush.bf16.msra.mxu0 %v1316
    %1333 = vmatpush.bf16.msra.mxu0 %v1315
    %1334 = vmatpush.bf16.msra.mxu0 %v1314
    %1335 = vmatpush.bf16.msra.mxu0 %v1313
    %1336 = vmatmul.bf16.gmra.mxu0 %v1326
    %v1337 = vpop.f32.mrf.mxu0
    %v1338 = vadd.f32 0.0, %v1337
    %v1339 = vpop.f32.mrf.mxu0
    %v1340 = vadd.f32 0.0, %v1339
    %1341 = vdwg.mxu0
    %v1342 = vmax.f32 %v1338, 0.0
    %v1343 = vmax.f32 %v1340, 0.0
    %v1344 = vld [vmem:[%s2 + $0x4] sm:$0x1]
    %v1345 = vperm.slane %v1344, 0
    %v1346 = vmul.f32 %v1342, %v1345
    %v1347 = vmul.f32 %v1343, %v1345
    %v1348 = vld [vmem:[%s2 + $0x5] sm:$0x1]
    %v1349 = vperm.slane %v1348, 0
    %v1350 = vadd.f32 %v1346, %v1349
    %v1351 = vadd.f32 %v1347, %v1349
    %v1352 = vadd.f32 %v1350, %v1223
    %v1353 = vadd.f32 %v1351, %v1224
    %v1356 = vrot.slane %v1352, 4
    %v1357 = vrot.slane %v1353, 4
    %v1358 = vsel %vm82, %v1356, %v1357
    %1359 = vrot.lane.b32.xlu0 %v1356, 32
    %v1360 = vpop.permute.xlu0 %1359
    %1361 = vrot.lane.b32.xlu0 %v1358, 32
    %v1362 = vpop.permute.xlu0 %1361
    %1363 = vrot.lane.b32.xlu0 %v1357, 32
    %v1364 = vpop.permute.xlu0 %1363
    %1368 = vrot.lane.b32.xlu0 %v1352, 64
    %v1369 = vpop.permute.xlu0 %1368
    %1370 = vrot.lane.b32.xlu0 %v1353, 64
    %v1371 = vpop.permute.xlu0 %1370
    %v1374 = vsel %vm91, 0.0, %v1360
    %v1375 = vsel %vm91, %v1352, %v1362
    %v1376 = vsel %vm91, %v1353, %v1364
    %v1377 = vsel %vm95, %v1374, %v1369
    %v1378 = vsel %vm95, %v1375, %v1371
    %v1379 = vsel %vm95, %v1376, %v508
    %v1380 = vpack.c.bf16 %v1378, %v1377
    %v1381 = vpack.c.bf16 %v1379, %v1379
    %v1382 = vld [vmem:[#allocation2 + $0xb0] sm:$0xf]
    %v1383 = vld [vmem:[#allocation2 + $0xb4] sm:$0xf]
    %v1384 = vld [vmem:[#allocation2 + $0xb8] sm:$0xf]
    %v1385 = vld [vmem:[#allocation2 + $0xbc] sm:$0xf]
    %v1386 = vld [vmem:[#allocation2 + $0xc0] sm:$0xf]
    %v1387 = vld [vmem:[#allocation2 + $0xc4] sm:$0xf]
    %v1388 = vld [vmem:[#allocation2 + $0xc8] sm:$0xf]
    %v1389 = vld [vmem:[#allocation2 + $0xcc] sm:$0xf]
    %v1390 = vld [vmem:[#allocation2 + $0xd0] sm:$0xf]
    %v1391 = vld [vmem:[#allocation2 + $0xd4] sm:$0xf]
    %v1392 = vld [vmem:[#allocation2 + $0xd8] sm:$0xf]
    %v1393 = vld [vmem:[#allocation2 + $0xdc] sm:$0xf]
    %v1396 = vrot.slane %v1380, 2
    %v1397 = vrot.slane %v1381, 2
    %v1398 = vsel %vm534, %v1396, %v1397
    %v1411 = vunpack.c.l.b16 %v1382
    %v1412 = vunpack.c.l.b16 %v1383
    %v1413 = vunpack.c.l.b16 %v1384
    %v1414 = vunpack.c.l.b16 %v1385
    %v1415 = vunpack.c.l.b16 %v1386
    %v1416 = vunpack.c.l.b16 %v1387
    %v1417 = vunpack.c.l.b16 %v1388
    %v1418 = vunpack.c.l.b16 %v1389
    %v1419 = vunpack.c.l.b16 %v1390
    %v1420 = vunpack.c.l.b16 %v1391
    %v1421 = vunpack.c.l.b16 %v1392
    %v1422 = vunpack.c.l.b16 %v1393
    %v1423 = vpack.c.b16 %v1412, %v1411
    %v1424 = vpack.c.b16 %v1414, %v1413
    %v1425 = vpack.c.b16 %v1416, %v1415
    %v1426 = vpack.c.b16 %v1418, %v1417
    %v1427 = vpack.c.b16 %v1420, %v1419
    %v1428 = vpack.c.b16 %v1422, %v1421
    %v1436 = vsel %vm99, %v1398, 0
    %1438 = vmatpush.bf16.msra.mxu0 0
    %1439 = vmatpush.bf16.msra.mxu0 0
    %1440 = vmatpush.bf16.msra.mxu0 %v1428
    %1441 = vmatpush.bf16.msra.mxu0 %v1427
    %1442 = vmatpush.bf16.msra.mxu0 %v1426
    %1443 = vmatpush.bf16.msra.mxu0 %v1425
    %1444 = vmatpush.bf16.msra.mxu0 %v1424
    %1445 = vmatpush.bf16.msra.mxu0 %v1423
    %1446 = vmatmul.bf16.gmra.mxu0 %v1436
    %v1447 = vpop.f32.mrf.mxu0
    %v1448 = vadd.f32 0.0, %v1447
    %v1449 = vpop.f32.mrf.mxu0
    %v1450 = vadd.f32 0.0, %v1449
    %1451 = vdwg.mxu0
    %v1452 = vmax.f32 %v1448, 0.0
    %v1453 = vmax.f32 %v1450, 0.0
    %v1454 = vld [vmem:[%s2 + $0x6] sm:$0x1]
    %v1455 = vperm.slane %v1454, 0
    %v1456 = vmul.f32 %v1452, %v1455
    %v1457 = vmul.f32 %v1453, %v1455
    %v1458 = vld [vmem:[%s2 + $0x7] sm:$0x1]
    %v1459 = vperm.slane %v1458, 0
    %v1460 = vadd.f32 %v1456, %v1459
    %v1461 = vadd.f32 %v1457, %v1459
    %v1462 = vadd.f32 %v1460, %v1352
    %v1463 = vadd.f32 %v1461, %v1353
    %1464 = vrot.lane.b32.xlu0 %v1223, 32
    %v1465 = vpop.permute.xlu0 %1464
    %1466 = vrot.lane.b32.xlu0 %v1224, 32
    %v1467 = vpop.permute.xlu0 %1466
    %1472 = vrot.lane.b32.xlu0 %v1462, 96
    %v1473 = vpop.permute.xlu0 %1472
    %1474 = vrot.lane.b32.xlu0 %v1463, 96
    %v1475 = vpop.permute.xlu0 %1474
    %v1478 = vsel %vm91, %v1106, %v1465
    %v1479 = vsel %vm91, %v1107, %v1467
    %v1480 = vsel %vm95, %v1478, %v1369
    %v1481 = vsel %vm95, %v1479, %v1371
    %v1482 = vsel %vm99, %v1480, %v1473
    %v1483 = vsel %vm99, %v1481, %v1475
    %s1484 = scalar_lea.vmem %s3, 16
    %1485 = vst [vmem:[%s1484] sm:$0xff] %v1482
    %1486 = vst [vmem:[%s1484 + $0x8] sm:$0xff] %v1483
    %1487 = vrot.lane.b32.xlu0 %v1352, 32
    %v1488 = vpop.permute.xlu0 %1487
    %1489 = vrot.lane.b32.xlu0 %v1353, 32
    %v1490 = vpop.permute.xlu0 %1489
    %1493 = vrot.lane.b32.xlu0 %v1462, 64
    %v1494 = vpop.permute.xlu0 %1493
    %1495 = vrot.lane.b32.xlu0 %v1463, 64
    %v1496 = vpop.permute.xlu0 %1495
    %v1499 = vsel %vm91, %v1223, %v1488
    %v1500 = vsel %vm91, %v1224, %v1490
    %v1501 = vsel %vm95, %v1499, %v1494
    %v1502 = vsel %vm95, %v1500, %v1496
    %v1503 = vpack.c.bf16 %v1502, %v1501
    %v1504 = vld [vmem:[#allocation2 + $0xe0] sm:$0xf]
    %v1505 = vld [vmem:[#allocation2 + $0xe4] sm:$0xf]
    %v1506 = vld [vmem:[#allocation2 + $0xe8] sm:$0xf]
    %v1507 = vld [vmem:[#allocation2 + $0xec] sm:$0xf]
    %v1508 = vld [vmem:[#allocation2 + $0xf0] sm:$0xf]
    %v1509 = vld [vmem:[#allocation2 + $0xf4] sm:$0xf]
    %v1510 = vld [vmem:[#allocation2 + $0xf8] sm:$0xf]
    %v1511 = vld [vmem:[#allocation2 + $0xfc] sm:$0xf]
    %v1512 = vld [vmem:[#allocation2 + $0x100] sm:$0xf]
    %v1513 = vld [vmem:[#allocation2 + $0x104] sm:$0xf]
    %v1514 = vld [vmem:[#allocation2 + $0x108] sm:$0xf]
    %v1515 = vld [vmem:[#allocation2 + $0x10c] sm:$0xf]
    %v1528 = vunpack.c.l.b16 %v1504
    %v1529 = vunpack.c.l.b16 %v1505
    %v1530 = vunpack.c.l.b16 %v1506
    %v1531 = vunpack.c.l.b16 %v1507
    %v1532 = vunpack.c.l.b16 %v1508
    %v1533 = vunpack.c.l.b16 %v1509
    %v1534 = vunpack.c.l.b16 %v1510
    %v1535 = vunpack.c.l.b16 %v1511
    %v1536 = vunpack.c.l.b16 %v1512
    %v1537 = vunpack.c.l.b16 %v1513
    %v1538 = vunpack.c.l.b16 %v1514
    %v1539 = vunpack.c.l.b16 %v1515
    %v1540 = vpack.c.b16 %v1529, %v1528
    %v1541 = vpack.c.b16 %v1531, %v1530
    %v1542 = vpack.c.b16 %v1533, %v1532
    %v1543 = vpack.c.b16 %v1535, %v1534
    %v1544 = vpack.c.b16 %v1537, %v1536
    %v1545 = vpack.c.b16 %v1539, %v1538
    %v1553 = vsel %vm99, %v1503, 0
    %1555 = vmatpush.bf16.msra.mxu0 0
    %1556 = vmatpush.bf16.msra.mxu0 0
    %1557 = vmatpush.bf16.msra.mxu0 %v1545
    %1558 = vmatpush.bf16.msra.mxu0 %v1544
    %1559 = vmatpush.bf16.msra.mxu0 %v1543
    %1560 = vmatpush.bf16.msra.mxu0 %v1542
    %1561 = vmatpush.bf16.msra.mxu0 %v1541
    %1562 = vmatpush.bf16.msra.mxu0 %v1540
    %1563 = vmatmul.bf16.gmra.mxu0 %v1553
    %v1564 = vpop.f32.mrf.mxu0
    %v1565 = vadd.f32 0.0, %v1564
    %v1566 = vpop.f32.mrf.mxu0
    %v1567 = vadd.f32 0.0, %v1566
    %1568 = vdwg.mxu0
    %v1569 = vmax.f32 %v1565, 0.0
    %v1570 = vmax.f32 %v1567, 0.0
    %v1571 = vld [vmem:[%s2 + $0x8] sm:$0x1]
    %v1572 = vperm.slane %v1571, 0
    %v1573 = vmul.f32 %v1569, %v1572
    %v1574 = vmul.f32 %v1570, %v1572
    %v1575 = vld [vmem:[%s2 + $0x9] sm:$0x1]
    %v1576 = vperm.slane %v1575, 0
    %v1577 = vadd.f32 %v1573, %v1576
    %v1578 = vadd.f32 %v1574, %v1576
    %v1579 = vpack.c.bf16 %v1578, %v1577
    %v1580 = vld [vmem:[#allocation2 + $0x110] sm:$0xf]
    %v1581 = vld [vmem:[#allocation2 + $0x114] sm:$0xf]
    %v1582 = vld [vmem:[#allocation2 + $0x118] sm:$0xf]
    %v1583 = vld [vmem:[#allocation2 + $0x11c] sm:$0xf]
    %v1584 = vld [vmem:[#allocation2 + $0x120] sm:$0xf]
    %v1585 = vld [vmem:[#allocation2 + $0x124] sm:$0xf]
    %v1586 = vld [vmem:[%s2 + $0xa] sm:$0x1]
    %v1587 = vperm.slane %v1586, 0
    %v1594 = vunpack.c.l.b16 %v1580
    %v1595 = vunpack.c.l.b16 %v1581
    %v1596 = vunpack.c.l.b16 %v1582
    %v1597 = vunpack.c.l.b16 %v1583
    %v1598 = vunpack.c.l.b16 %v1584
    %v1599 = vunpack.c.l.b16 %v1585
    %v1600 = vpack.c.b16 %v1595, %v1594
    %v1601 = vpack.c.b16 %v1597, %v1596
    %v1602 = vpack.c.b16 %v1599, %v1598
    %v1607 = vsel %vm744, %v1579, 0
    %1609 = vmatpush.bf16.msra.mxu0 0
    %1610 = vmatpush.bf16.msra.mxu0 0
    %1611 = vmatpush.bf16.msra.mxu0 0
    %1612 = vmatpush.bf16.msra.mxu0 0
    %1613 = vmatpush.bf16.msra.mxu0 0
    %1614 = vmatpush.bf16.msra.mxu0 %v1602
    %1615 = vmatpush.bf16.msra.mxu0 %v1601
    %1616 = vmatpush.bf16.msra.mxu0 %v1600
    %1617 = vmatmul.bf16.gmra.mxu0 %v1607
    %v1618 = vpop.f32.mrf.mxu0
    %v1619 = vadd.f32 %v1587, %v1618
    %v1620 = vpop.f32.mrf.mxu0
    %v1621 = vadd.f32 %v1587, %v1620
    %1622 = vdwg.mxu0
    %v1623 = vtanh.pop %v1619
    %v1624 = vtanh.pop %v1621
    %v1625 = vld [vmem:[%s2 + $0xb] sm:$0x1]
    %v1626 = vperm.slane %v1625, 0
    %v1627 = vmul.f32 %v1623, %v1626
    %v1628 = vmul.f32 %v1624, %v1626
    %v1629 = vsel %vm768, %v1627, 0.0
    %1630 = vadd.xlane.f32.xlu0 %v1629
    %v1631 = vpop.xlane.xlu0 %1630
    %v1632 = vsel %vm768, %v1628, 0.0
    %1633 = vadd.xlane.f32.xlu0 %v1632
    %v1634 = vpop.xlane.xlu0 %1633
    %v1635 = vmax.f32 %v1631, %v1634
    %v1636 = vrot.slane %v1635, 4
    %v1637 = vmax.f32 %v1635, %v1636
    %v1638 = vrot.slane %v1637, 2
    %v1639 = vmax.f32 %v1637, %v1638
    %v1640 = vrot.slane %v1639, 1
    %v1641 = vmax.f32 %v1639, %v1640
    %v1642 = vsub.f32 %v1631, %v1641
    %v1643 = vsub.f32 %v1634, %v1641
    %v1644 = vmul.f32 %v1642, 1.442695
    %v1645 = vpow.pop %v1644
    %v1646 = vmul.f32 %v1643, 1.442695
    %v1647 = vpow.pop %v1646
    %v1648 = vadd.f32 %v1645, %v1647
    %v1649 = vrot.slane %v1648, 4
    %v1650 = vadd.f32 %v1648, %v1649
    %v1651 = vrot.slane %v1650, 2
    %v1652 = vadd.f32 %v1650, %v1651
    %v1653 = vrot.slane %v1652, 1
    %v1654 = vadd.f32 %v1652, %v1653
    %v1655 = vrcp.pop %v1654
    %v1656 = vmul.f32 %v1645, %v1655
    %v1657 = vmul.f32 %v1647, %v1655
    %v1658 = vmul.f32 %v1656, %v1577
    %v1659 = vmul.f32 %v1657, %v1578
    %v1660 = vsel %vm744, %v1658, 0.0
    %v1661 = vsel %vm744, %v1659, 0.0
    %v1662 = vadd.f32 %v1660, %v1661
    %v1663 = vrot.slane %v1662, 4
    %v1664 = vadd.f32 %v1662, %v1663
    %v1665 = vrot.slane %v1664, 2
    %v1666 = vadd.f32 %v1664, %v1665
    %v1667 = vrot.slane %v1666, 1
    %v1668 = vadd.f32 %v1666, %v1667
    %v1669 = vsub.f32 %v1577, %v1668
    %v1670 = vsub.f32 %v1578, %v1668
    %v1671 = vmul.f32 %v1656, %v1669
    %v1672 = vmul.f32 %v1657, %v1670
    %v1673 = vmul.f32 %v1671, %v1669
    %v1674 = vmul.f32 %v1672, %v1670
    %v1675 = vsel %vm744, %v1673, 0.0
    %v1676 = vsel %vm744, %v1674, 0.0
    %v1677 = vadd.f32 %v1675, %v1676
    %v1678 = vrot.slane %v1677, 4
    %v1679 = vadd.f32 %v1677, %v1678
    %v1680 = vrot.slane %v1679, 2
    %v1681 = vadd.f32 %v1679, %v1680
    %v1682 = vrot.slane %v1681, 1
    %v1683 = vadd.f32 %v1681, %v1682
    %v1684 = vmax.f32 %v1683, 1e-08
    %v1685 = vrsqrt.pop %v1684
    %v1686 = vmul.f32 %v1685, %v1684
    %v1687 = vmul.f32 %v1686, %v1685
    %v1688 = vmul.f32 0.5, %v1687
    %v1689 = vsub.f32 1.5, %v1688
    %v1690 = vmul.f32 %v1685, %v1689
    %v1691 = vmul.f32 %v1684, %v1690
    %vm1692 = vcmp.eq.f32.partialorder %v1684, inf
    %v1693 = vsel %vm1692, %v1684, %v1691
    %vm1694 = vcmp.eq.f32.partialorder %v1684, 0.0
    %v1695 = vand.u32 %v1684, 2147483648
    %v1696 = vsel %vm1694, %v1695, %v1693
    %1698 = vrot.lane.b32.xlu0 %v1696, 48
    %v1699 = vpop.permute.xlu0 %1698
    %v1701 = vsel %vm744, %v1668, %v1699
    %v1702 = vld [vmem:[%s2 + $0xc] sm:$0x1]
    %v1703 = vmul.f32 %v1701, %v1702
    %v1704 = vld [vmem:[%s2 + $0xd] sm:$0x1]
    %v1705 = vadd.f32 %v1703, %v1704
    %v1706 = vpack.c.bf16 %v1705, %v1705
    %v1707 = vld [vmem:[#allocation2 + $0x128] sm:$0xf]
    %v1708 = vld [vmem:[#allocation2 + $0x12c] sm:$0xf]
    %v1709 = vld [vmem:[#allocation2 + $0x130] sm:$0xf]
    %v1710 = vld [vmem:[#allocation2 + $0x134] sm:$0xf]
    %v1711 = vld [vmem:[#allocation2 + $0x138] sm:$0xf]
    %v1712 = vld [vmem:[#allocation2 + $0x13c] sm:$0xf]
    %v1713 = vld [vmem:[#allocation2 + $0x140] sm:$0xf]
    %v1714 = vld [vmem:[#allocation2 + $0x144] sm:$0xf]
    %v1715 = vld [vmem:[#allocation2 + $0x148] sm:$0xf]
    %v1716 = vld [vmem:[#allocation2 + $0x14c] sm:$0xf]
    %v1717 = vld [vmem:[#allocation2 + $0x150] sm:$0xf]
    %v1718 = vld [vmem:[#allocation2 + $0x154] sm:$0xf]
    %v1719 = vld [vmem:[%s2 + $0xe] sm:$0x1]
    %v1732 = vunpack.c.l.b16 %v1707
    %v1733 = vunpack.c.l.b16 %v1708
    %v1734 = vunpack.c.l.b16 %v1709
    %v1735 = vunpack.c.l.b16 %v1710
    %v1736 = vunpack.c.l.b16 %v1711
    %v1737 = vunpack.c.l.b16 %v1712
    %v1738 = vunpack.c.l.b16 %v1713
    %v1739 = vunpack.c.l.b16 %v1714
    %v1740 = vunpack.c.l.b16 %v1715
    %v1741 = vunpack.c.l.b16 %v1716
    %v1742 = vunpack.c.l.b16 %v1717
    %v1743 = vunpack.c.l.b16 %v1718
    %v1744 = vpack.c.b16 %v1733, %v1732
    %v1745 = vpack.c.b16 %v1735, %v1734
    %v1746 = vpack.c.b16 %v1737, %v1736
    %v1747 = vpack.c.b16 %v1739, %v1738
    %v1748 = vpack.c.b16 %v1741, %v1740
    %v1749 = vpack.c.b16 %v1743, %v1742
    %v1757 = vsel %vm99, %v1706, 0
    %1759 = vmatpush.bf16.msra.mxu0 0
    %1760 = vmatpush.bf16.msra.mxu0 0
    %1761 = vmatpush.bf16.msra.mxu0 %v1749
    %1762 = vmatpush.bf16.msra.mxu0 %v1748
    %1763 = vmatpush.bf16.msra.mxu0 %v1747
    %1764 = vmatpush.bf16.msra.mxu0 %v1746
    %1765 = vmatpush.bf16.msra.mxu0 %v1745
    %1766 = vmatpush.bf16.msra.mxu0 %v1744
    %1767 = vmatmul.bf16.gmra.mxu0 %v1757
    %v1768 = vpop.f32.mrf.mxu0
    %v1769 = vadd.f32 %v1719, %v1768
    %v1770 = vpop.f32.mrf.mxu0
    %1771 = vdwg.mxu0
    %1772 = vst [vmem:[#allocation5 + $0x1] sm:$0x1] %v1769
    // Predicated region
    $region18: #{feature_extractor_forward.1} parent=1 // pred_check
      _
    $region19: #{feature_extractor_forward.1} parent=1 // pred_check_branch
      %1774 = sbr.rel (0) target = $region21
    $region20: #{feature_extractor_forward.1} parent=1 // pred_region
      _
    $region21: #{feature_extractor_forward.1} parent=1 // pred_fallthru
      _
    // Predicated region
    $region22: #{feature_extractor_forward.1} parent=1 // pred_check
      _
    $region23: #{feature_extractor_forward.1} parent=1 // pred_check_branch
      %1776 = sbr.rel (0) target = $region25
    $region24: #{feature_extractor_forward.1} parent=1 // pred_region
      %1778 = vsyncadd [#allocation4], 0
      %s1780 = sshll.u32 [#allocation5], 4
      %s1781 = int_to_ptr.vmem [resolvable:$true] %s1780
      %s1782 = sshll.u32 %s4, 4
      %s1783 = int_to_ptr.hbm [resolvable:$true] %s1782
      %1785 = dma.vmem_to_hbm [thread:$0]  %s1781, 32, %s1783, [#allocation4]
    $region25: #{feature_extractor_forward.1} parent=1 // pred_fallthru
      _
    // Predicated region
    $region26: #{feature_extractor_forward.1} parent=1 // pred_check
      _
    $region27: #{feature_extractor_forward.1} parent=1 // pred_check_branch
      %1787 = sbr.rel (0) target = $region29
    $region28: #{feature_extractor_forward.1} parent=1 // pred_region
      _
    $region29: #{feature_extractor_forward.1} parent=1 // pred_fallthru
      _
    // Predicated region
    $region30: #{feature_extractor_forward.1} parent=1 // pred_check
      _
    $region31: #{feature_extractor_forward.1} parent=1 // pred_check_branch
      %1789 = sbr.rel (0) target = $region33
    $region32: #{feature_extractor_forward.1} parent=1 // pred_region
      %1791 = dma.done [#allocation4], 32
    $region33: #{feature_extractor_forward.1} parent=1 // pred_fallthru
      _
    %1792 = vsyncpa [#allocation3], 1
    %1793 = vsyncpa [#allocation4], 1

</llo_original>
